<compile_context>
chip_gen: v6e
topology: v6e:2x2x1
jax: 0.10.0
libtpu: 0.0.40
codegen_flags: <defaults>
</compile_context>

<pallas_src>
import jax
import jax.numpy as jnp
from jax.experimental import pallas as pl
from jax.experimental.pallas import tpu as pltpu

EMBED = 100                      # embeds_size
HEADS = 4                        # num_heads
HEAD_DIM = EMBED // HEADS        # 25
EMBED_PAD = 128                  # lane-padded embedding
HEAD_DIM_PAD = 32                # lane-aligned per-head dim
HP = HEADS * HEAD_DIM_PAD        # 128 (padded concat-of-heads width)
FFN = 2 * EMBED                  # 200
FFN_PAD = 256                    # lane-padded FFN width
LN_EPS = 1e-5
LEAKY_SLOPE = 0.01               # nn.LeakyReLU default
SCALE = 1.0 / (HEAD_DIM ** 0.5)  # PyTorch scales by the REAL head dim (25)
# bf16 matmul operands -> native MXU throughput on v5e/v6e/v7x (f32 accumulate kept via
# preferred_element_type).  Set back to jnp.float32 for near-exact f32 parity.
MM_DTYPE = jnp.bfloat16


def _cdiv(a, b):
    return -(-a // b)


def _layernorm(x, w, b, mask):
    """LayerNorm over the first EMBED lanes of a lane-padded (N, 128) slab (f32 math).

    Assumes padded lanes of `x` are zero, so the mean can use sum/EMBED directly;
    the centered values are masked so variance and output ignore padded lanes.
    """
    mu = jnp.sum(x, axis=-1, keepdims=True) * (1.0 / EMBED)
    xc = (x - mu) * mask
    var = jnp.sum(xc * xc, axis=-1, keepdims=True) * (1.0 / EMBED)
    inv = jax.lax.rsqrt(var + LN_EPS)
    return xc * inv * w + b


def block_kernel(x_ref, wqkv_ref, bqkv_ref, wo_ref, bo_ref,
                 ln1w_ref, ln1b_ref, w1_ref, b1_ref, w2_ref, b2_ref,
                 ln2w_ref, ln2b_ref, o_ref):
    Bt, S, EP = x_ref.shape
    x = x_ref[...].reshape(Bt * S, EP)                 # (Bt*S, 128) lane-dense f32 slab

    # Lane mask: only the first EMBED (=100) lanes carry real features.
    lane = jax.lax.broadcasted_iota(jnp.int32, (1, EP), 1)
    mask = (lane < EMBED).astype(jnp.float32)

    # ---- fused QKV projection: one big bf16 MXU matmul over the whole slab ----
    qkv = jnp.dot(x.astype(MM_DTYPE), wqkv_ref[...],
                  preferred_element_type=jnp.float32) + bqkv_ref[...]   # (Bt*S, 384) f32

    q = qkv[:, 0 * HP:1 * HP].reshape(Bt, S, HP)       # head-major, head dim padded to 32
    k = qkv[:, 1 * HP:2 * HP].reshape(Bt, S, HP)
    v = qkv[:, 2 * HP:3 * HP].reshape(Bt, S, HP)

    # ---- per-head attention, accumulated straight into the output projection ----
    # (no jnp.concatenate of heads; ctx_h @ wo_slice has identical MXU cost.)
    attn = jnp.zeros((Bt * S, EP), jnp.float32)
    for h in range(HEADS):
        lo, hi = h * HEAD_DIM_PAD, (h + 1) * HEAD_DIM_PAD
        qh, kh, vh = q[:, :, lo:hi], k[:, :, lo:hi], v[:, :, lo:hi]   # (Bt, S, 32) f32
        scores = jnp.einsum('bqd,bkd->bqk', qh, kh,
                            preferred_element_type=jnp.float32) * SCALE   # (Bt, S, S)
        scores = scores - jnp.max(scores, axis=-1, keepdims=True)
        probs = jnp.exp(scores)
        probs = probs * pl.reciprocal(jnp.sum(probs, axis=-1, keepdims=True),
                                      approx=True)
        ctx_h = jnp.einsum('bqk,bkd->bqd', probs, vh,
                           preferred_element_type=jnp.float32)            # (Bt, S, 32)
        attn = attn + jnp.dot(ctx_h.reshape(Bt * S, HEAD_DIM_PAD).astype(MM_DTYPE),
                              wo_ref[lo:hi, :],
                              preferred_element_type=jnp.float32)
    attn = attn + bo_ref[...]

    # ---- drop1 -> identity ; residual + LayerNorm1 (f32 VPU math) ----
    out1 = _layernorm(x + attn, ln1w_ref[...], ln1b_ref[...], mask)

    # ---- FFN: Linear(E, 2E) -> LeakyReLU -> Linear(2E, E) (bf16 MXU, f32 acc) ----
    h1 = jnp.dot(out1.astype(MM_DTYPE), w1_ref[...],
                 preferred_element_type=jnp.float32) + b1_ref[...]    # (Bt*S, 256)
    h1 = jnp.where(h1 >= 0.0, h1, LEAKY_SLOPE * h1)
    ffn = jnp.dot(h1.astype(MM_DTYPE), w2_ref[...],
                  preferred_element_type=jnp.float32) + b2_ref[...]   # (Bt*S, 128)

    # drop2 -> identity ; residual + LayerNorm2
    out2 = _layernorm(out1 + ffn, ln2w_ref[...], ln2b_ref[...], mask)
    o_ref[...] = out2.reshape(Bt, S, EP)


def _prepare_params(p):
    """One-time host-side padding / transposition / head-reordering / bf16 cast.

    Weight MATRICES are cast to MM_DTYPE here so no per-grid-step casts are emitted in
    the kernel; biases and LayerNorm params stay f32 (they feed f32 VPU math only).
    """
    E, EP, H, HD, HDP = EMBED, EMBED_PAD, HEADS, HEAD_DIM, HEAD_DIM_PAD

    # QKV projection: (3E, E) -> (E_pad, 3*H*HDP), head-major with padded head dim.
    w = p["in_w"].reshape(3, H, HD, E)
    w = jnp.pad(w, ((0, 0), (0, 0), (0, HDP - HD), (0, EP - E)))
    wqkv = w.transpose(3, 0, 1, 2).reshape(EP, 3 * H * HDP).astype(MM_DTYPE)  # (128, 384)
    b = p["in_b"].reshape(3, H, HD)
    bqkv = jnp.pad(b, ((0, 0), (0, 0), (0, HDP - HD))).reshape(1, 3 * H * HDP)

    # Output projection: pre-transposed, rows reordered to the head-major padded ctx layout.
    wo = p["out_w"].T.reshape(H, HD, E)
    wo = jnp.pad(wo, ((0, 0), (0, HDP - HD), (0, EP - E))).reshape(H * HDP, EP)
    wo = wo.astype(MM_DTYPE)                                                   # (128, 128)
    bo = jnp.pad(p["out_b"], ((0, 0), (0, EP - E)))

    ln1_w = jnp.pad(p["ln1_w"], ((0, 0), (0, EP - E)))
    ln1_b = jnp.pad(p["ln1_b"], ((0, 0), (0, EP - E)))
    ln2_w = jnp.pad(p["ln2_w"], ((0, 0), (0, EP - E)))
    ln2_b = jnp.pad(p["ln2_b"], ((0, 0), (0, EP - E)))

    w1 = jnp.pad(p["w1"].T, ((0, EP - E), (0, FFN_PAD - FFN))).astype(MM_DTYPE)  # (128, 256)
    b1 = jnp.pad(p["b1"], ((0, 0), (0, FFN_PAD - FFN)))
    w2 = jnp.pad(p["w2"].T, ((0, FFN_PAD - FFN), (0, EP - E))).astype(MM_DTYPE)  # (256, 128)
    b2 = jnp.pad(p["b2"], ((0, 0), (0, EP - E)))

    return [wqkv, bqkv, wo, bo, ln1_w, ln1_b, w1, b1, w2, b2, ln2_w, ln2_b]


def transformer_block(x, params, block_batch=None, unpad=True):
    B, S, E = x.shape
    assert E == EMBED
    EP = EMBED_PAD

    if block_batch is None:
        # Target >= 512 MXU rows per grid step (2x the 256-wide v6e/v7x MXU).  At ~7 KiB
        # of f32 live intermediates per row this stays well under the 32 MiB scoped-VMEM
        # default on every generation (incl. v7x's 64 MiB physical VMEM).
        rows_target = 512
        bt = min(B, max(1, rows_target // S))
        n = _cdiv(B, bt)
        # Keep the grid length even (and >= 2) when B allows, so v7x's two TensorCores
        # both get work under dimension_semantics=("parallel",); no-op cost on 1-TC chips.
        if B >= 2 and (n < 2 or n % 2 == 1):
            n = max(2, n + (n % 2))
            bt = _cdiv(B, n)
        block_batch = max(1, bt)
    Bt = block_batch
    n_tiles = _cdiv(B, Bt)
    Bp = n_tiles * Bt

    xp = jnp.pad(x, ((0, Bp - B), (0, 0), (0, EP - E)))
    plist = _prepare_params(params)

    def _const_spec(shape):
        nd = len(shape)
        # Constant block index -> the Pallas pipeline skips re-DMA after the first step,
        # so the weights stay resident in VMEM across the whole batch grid.
        # (Default pipelining still double-buffers them: ~2x ~260 KiB bf16 — acceptable.)
        return pl.BlockSpec(shape, lambda b, _n=nd: (0,) * _n)

    in_specs = [pl.BlockSpec((Bt, S, EP), lambda b: (b, 0, 0))] + \
               [_const_spec(p.shape) for p in plist]

    # Advisory cost estimate so XLA can schedule/overlap the custom call.
    flops = int(2 * Bp * S * (EP * 3 * HP + HP * EP + EP * FFN_PAD + FFN_PAD * EP)
                + 4 * Bp * HEADS * S * S * HEAD_DIM_PAD)
    transcendentals = int(Bp * HEADS * S * S + Bp * HEADS * S + 2 * Bp * S)
    bytes_accessed = int(2 * Bp * S * EP * 4
                         + sum(int(p.size) * p.dtype.itemsize for p in plist))

    out = pl.pallas_call(
        block_kernel,
        out_shape=jax.ShapeDtypeStruct((Bp, S, EP), jnp.float32),
        grid=(n_tiles,),
        in_specs=in_specs,
        out_specs=pl.BlockSpec((Bt, S, EP), lambda b: (b, 0, 0)),
        compiler_params=pltpu.CompilerParams(
            dimension_semantics=("parallel",)),   # batch tiles split across TCs on v7x
        cost_estimate=pl.CostEstimate(flops=flops,
                                      transcendentals=transcendentals,
                                      bytes_accessed=bytes_accessed),
    )(xp, *plist)

    if unpad:
        # NOTE: this slice is an extra HBM read+write outside the kernel; callers that can
        # consume the zero-padded (Bp, S, 128) slab directly should pass unpad=False.
        return out[:B, :, :EMBED]
    return out


def reference_block(x, p):
    """Pure-JAX f32 reference with the module's exact math (eval mode), unpadded params."""
    def ln(t, w, b):
        mu = jnp.mean(t, axis=-1, keepdims=True)
        var = jnp.mean((t - mu) ** 2, axis=-1, keepdims=True)
        return (t - mu) / jnp.sqrt(var + LN_EPS) * w[0] + b[0]

    B, S, E = x.shape
    qkv = x @ p["in_w"].T + p["in_b"][0]
    q, k, v = qkv[..., :E], qkv[..., E:2 * E], qkv[..., 2 * E:]
    q = q.reshape(B, S, HEADS, HEAD_DIM).transpose(0, 2, 1, 3)
    k = k.reshape(B, S, HEADS, HEAD_DIM).transpose(0, 2, 1, 3)
    v = v.reshape(B, S, HEADS, HEAD_DIM).transpose(0, 2, 1, 3)
    s = jnp.einsum("bhqd,bhkd->bhqk", q, k) / (HEAD_DIM ** 0.5)
    pmat = jax.nn.softmax(s, axis=-1)
    attn = jnp.einsum("bhqk,bhkd->bhqd", pmat, v).transpose(0, 2, 1, 3).reshape(B, S, E)
    attn = attn @ p["out_w"].T + p["out_b"][0]
    out1 = ln(x + attn, p["ln1_w"], p["ln1_b"])
    h1 = out1 @ p["w1"].T + p["b1"][0]
    h1 = jnp.where(h1 >= 0, h1, LEAKY_SLOPE * h1)
    ffn = h1 @ p["w2"].T + p["b2"][0]
    return ln(out1 + ffn, p["ln2_w"], p["ln2_b"])


def init_params(key):
    ks = jax.random.split(key, 8)
    E = EMBED
    return {
        "in_w":  0.05 * jax.random.normal(ks[0], (3 * E, E), jnp.float32),
        "in_b":  0.01 * jax.random.normal(ks[1], (1, 3 * E), jnp.float32),
        "out_w": 0.05 * jax.random.normal(ks[2], (E, E), jnp.float32),
        "out_b": 0.01 * jax.random.normal(ks[3], (1, E), jnp.float32),
        "ln1_w": jnp.ones((1, E), jnp.float32),
        "ln1_b": jnp.zeros((1, E), jnp.float32),
        "w1":    0.05 * jax.random.normal(ks[4], (2 * E, E), jnp.float32),
        "b1":    0.01 * jax.random.normal(ks[5], (1, 2 * E), jnp.float32),
        "w2":    0.05 * jax.random.normal(ks[6], (E, 2 * E), jnp.float32),
        "b2":    0.01 * jax.random.normal(ks[7], (1, E), jnp.float32),
        "ln2_w": jnp.ones((1, E), jnp.float32),
        "ln2_b": jnp.zeros((1, E), jnp.float32),
    }


if __name__ == "__main__":
    key = jax.random.PRNGKey(0)
    pkey, xkey = jax.random.split(key)
    params = init_params(pkey)

    B, S = 2, 8
    x = jax.random.normal(xkey, (B, S, EMBED), jnp.float32)

    out = transformer_block(x, params)
    out = jax.block_until_ready(out)

    ref = reference_block(x, params)
    assert out.shape == (B, S, EMBED)
    # Tolerance 4e-2: bf16 MXU operands (f32 accumulate) plus the EUP approximate
    # reciprocal in the softmax; set MM_DTYPE = jnp.float32 for ~1e-3-level parity.
    assert jnp.allclose(out, ref, atol=4e-2, rtol=4e-2), float(jnp.max(jnp.abs(out - ref)))
    print("KERNEL_OK")
</pallas_src>

<mosaic_0001>
module attributes {stable_mosaic.version = 11 : i64} {
  func.func @block_kernel(%arg0: i32, %arg1: memref<1x8x128xf32, #tpu.memory_space<vmem>>, %arg2: memref<128x384xbf16, #tpu.memory_space<vmem>>, %arg3: memref<1x384xf32, #tpu.memory_space<vmem>>, %arg4: memref<128x128xbf16, #tpu.memory_space<vmem>>, %arg5: memref<1x128xf32, #tpu.memory_space<vmem>>, %arg6: memref<1x128xf32, #tpu.memory_space<vmem>>, %arg7: memref<1x128xf32, #tpu.memory_space<vmem>>, %arg8: memref<128x256xbf16, #tpu.memory_space<vmem>>, %arg9: memref<1x256xf32, #tpu.memory_space<vmem>>, %arg10: memref<256x128xbf16, #tpu.memory_space<vmem>>, %arg11: memref<1x128xf32, #tpu.memory_space<vmem>>, %arg12: memref<1x128xf32, #tpu.memory_space<vmem>>, %arg13: memref<1x128xf32, #tpu.memory_space<vmem>>, %arg14: memref<1x8x128xf32, #tpu.memory_space<vmem>>) attributes {dimension_semantics = [#tpu.dimension_semantics<parallel>], iteration_bounds = array<i64: 2>, scalar_prefetch = 0 : i64, scratch_operands = 0 : i64, tpu.core_type = #tpu.core_type<tc>, window_params = [{transform_indices = @transform_0, window_bounds = array<i64: 1, 8, 128>}, {pipeline_mode = #tpu.pipeline_mode<synchronous>, transform_indices = @transform_1, window_bounds = array<i64: 128, 384>}, {pipeline_mode = #tpu.pipeline_mode<synchronous>, transform_indices = @transform_2, window_bounds = array<i64: 1, 384>}, {pipeline_mode = #tpu.pipeline_mode<synchronous>, transform_indices = @transform_3, window_bounds = array<i64: 128, 128>}, {pipeline_mode = #tpu.pipeline_mode<synchronous>, transform_indices = @transform_4, window_bounds = array<i64: 1, 128>}, {pipeline_mode = #tpu.pipeline_mode<synchronous>, transform_indices = @transform_5, window_bounds = array<i64: 1, 128>}, {pipeline_mode = #tpu.pipeline_mode<synchronous>, transform_indices = @transform_6, window_bounds = array<i64: 1, 128>}, {pipeline_mode = #tpu.pipeline_mode<synchronous>, transform_indices = @transform_7, window_bounds = array<i64: 128, 256>}, {pipeline_mode = #tpu.pipeline_mode<synchronous>, transform_indices = @transform_8, window_bounds = array<i64: 1, 256>}, {pipeline_mode = #tpu.pipeline_mode<synchronous>, transform_indices = @transform_9, window_bounds = array<i64: 256, 128>}, {pipeline_mode = #tpu.pipeline_mode<synchronous>, transform_indices = @transform_10, window_bounds = array<i64: 1, 128>}, {pipeline_mode = #tpu.pipeline_mode<synchronous>, transform_indices = @transform_11, window_bounds = array<i64: 1, 128>}, {pipeline_mode = #tpu.pipeline_mode<synchronous>, transform_indices = @transform_12, window_bounds = array<i64: 1, 128>}, {transform_indices = @transform_13, window_bounds = array<i64: 1, 8, 128>}]} {
    %c0 = arith.constant 0 : index
    %c0_0 = arith.constant 0 : index
    %c0_1 = arith.constant 0 : index
    %0 = vector.load %arg1[%c0, %c0_0, %c0_1] : memref<1x8x128xf32, #tpu.memory_space<vmem>>, vector<1x8x128xf32>
    %1 = vector.shape_cast %0 : vector<1x8x128xf32> to vector<8x128xf32>
    %2 = tpu.iota {dimensions = array<i32: 1>} : vector<1x128xi32>
    %c100_i32 = arith.constant 100 : i32
    %3 = vector.broadcast %c100_i32 : i32 to vector<1x128xi32>
    %4 = arith.cmpi slt, %2, %3 : vector<1x128xi32>
    %5 = arith.extui %4 : vector<1x128xi1> to vector<1x128xi32>
    %6 = arith.sitofp %5 : vector<1x128xi32> to vector<1x128xf32>
    %7 = arith.truncf %1 : vector<8x128xf32> to vector<8x128xbf16>
    %c0_2 = arith.constant 0 : index
    %c0_3 = arith.constant 0 : index
    %8 = vector.load %arg2[%c0_2, %c0_3] : memref<128x384xbf16, #tpu.memory_space<vmem>>, vector<128x384xbf16>
    %cst = arith.constant dense<0.000000e+00> : vector<8x384xf32>
    %9 = tpu.matmul %7, %8, %cst {dimension_numbers = #tpu.dot_dimension_numbers<[1], [0], [0], [1], [0, 0, 1, 1], [], []>} : vector<8x128xbf16>, vector<128x384xbf16>, vector<8x384xf32> -> vector<8x384xf32>
    %c0_4 = arith.constant 0 : index
    %c0_5 = arith.constant 0 : index
    %10 = vector.load %arg3[%c0_4, %c0_5] : memref<1x384xf32, #tpu.memory_space<vmem>>, vector<1x384xf32>
    %11 = vector.broadcast %10 : vector<1x384xf32> to vector<8x384xf32>
    %12 = arith.addf %9, %11 : vector<8x384xf32>
    %13 = vector.extract_strided_slice %12 {offsets = [0, 0], sizes = [8, 128], strides = [1, 1]} : vector<8x384xf32> to vector<8x128xf32>
    %14 = vector.shape_cast %13 : vector<8x128xf32> to vector<1x8x128xf32>
    %15 = vector.extract_strided_slice %12 {offsets = [0, 128], sizes = [8, 128], strides = [1, 1]} : vector<8x384xf32> to vector<8x128xf32>
    %16 = vector.shape_cast %15 : vector<8x128xf32> to vector<1x8x128xf32>
    %17 = vector.extract_strided_slice %12 {offsets = [0, 256], sizes = [8, 128], strides = [1, 1]} : vector<8x384xf32> to vector<8x128xf32>
    %18 = vector.shape_cast %17 : vector<8x128xf32> to vector<1x8x128xf32>
    %cst_6 = arith.constant 0.000000e+00 : f32
    %19 = vector.broadcast %cst_6 : f32 to vector<8x128xf32>
    %20 = vector.extract_strided_slice %14 {offsets = [0, 0, 0], sizes = [1, 8, 32], strides = [1, 1, 1]} : vector<1x8x128xf32> to vector<1x8x32xf32>
    %21 = vector.extract_strided_slice %16 {offsets = [0, 0, 0], sizes = [1, 8, 32], strides = [1, 1, 1]} : vector<1x8x128xf32> to vector<1x8x32xf32>
    %22 = vector.extract_strided_slice %18 {offsets = [0, 0, 0], sizes = [1, 8, 32], strides = [1, 1, 1]} : vector<1x8x128xf32> to vector<1x8x32xf32>
    "tpu.trace_start"() <{level = 10 : i32, message = "bqd,bkd->bqk"}> : () -> ()
    %cst_7 = arith.constant dense<0.000000e+00> : vector<1x8x8xf32>
    %23 = tpu.matmul %20, %21, %cst_7 {dimension_numbers = #tpu.dot_dimension_numbers<[2], [2], [1], [1], [0, 0, 0, 1, 1, 1], [0], [0]>} : vector<1x8x32xf32>, vector<1x8x32xf32>, vector<1x8x8xf32> -> vector<1x8x8xf32>
    "tpu.trace_stop"() : () -> ()
    %cst_8 = arith.constant 2.000000e-01 : f32
    %24 = vector.broadcast %cst_8 : f32 to vector<1x8x8xf32>
    %25 = arith.mulf %23, %24 : vector<1x8x8xf32>
    %cst_9 = arith.constant dense<0xFF800000> : vector<1x8xf32>
    %26 = vector.multi_reduction <maximumf>, %25, %cst_9 [2] : vector<1x8x8xf32> to vector<1x8xf32>
    %27 = vector.shape_cast %26 : vector<1x8xf32> to vector<1x8x1xf32>
    %28 = vector.broadcast %27 : vector<1x8x1xf32> to vector<1x8x8xf32>
    %29 = arith.subf %25, %28 : vector<1x8x8xf32>
    %30 = math.exp %29 : vector<1x8x8xf32>
    %cst_10 = arith.constant dense<0.000000e+00> : vector<1x8xf32>
    %31 = vector.multi_reduction <add>, %30, %cst_10 [2] : vector<1x8x8xf32> to vector<1x8xf32>
    %32 = vector.shape_cast %31 : vector<1x8xf32> to vector<1x8x1xf32>
    %33 = tpu.reciprocal %32 {approx = true} : vector<1x8x1xf32> -> vector<1x8x1xf32>
    %34 = vector.broadcast %33 : vector<1x8x1xf32> to vector<1x8x8xf32>
    %35 = arith.mulf %30, %34 : vector<1x8x8xf32>
    "tpu.trace_start"() <{level = 10 : i32, message = "bqk,bkd->bqd"}> : () -> ()
    %cst_11 = arith.constant dense<0.000000e+00> : vector<1x8x32xf32>
    %36 = tpu.matmul %35, %22, %cst_11 {dimension_numbers = #tpu.dot_dimension_numbers<[2], [1], [1], [2], [0, 0, 0, 1, 1, 2], [0], [0]>} : vector<1x8x8xf32>, vector<1x8x32xf32>, vector<1x8x32xf32> -> vector<1x8x32xf32>
    "tpu.trace_stop"() : () -> ()
    %37 = vector.shape_cast %36 : vector<1x8x32xf32> to vector<8x32xf32>
    %38 = arith.truncf %37 : vector<8x32xf32> to vector<8x32xbf16>
    %c0_12 = arith.constant 0 : index
    %c0_13 = arith.constant 0 : index
    %39 = vector.load %arg4[%c0_12, %c0_13] : memref<128x128xbf16, #tpu.memory_space<vmem>>, vector<32x128xbf16>
    %cst_14 = arith.constant dense<0.000000e+00> : vector<8x128xf32>
    %40 = tpu.matmul %38, %39, %cst_14 {dimension_numbers = #tpu.dot_dimension_numbers<[1], [0], [0], [1], [0, 0, 1, 1], [], []>} : vector<8x32xbf16>, vector<32x128xbf16>, vector<8x128xf32> -> vector<8x128xf32>
    %41 = arith.addf %19, %40 : vector<8x128xf32>
    %42 = vector.extract_strided_slice %14 {offsets = [0, 0, 32], sizes = [1, 8, 32], strides = [1, 1, 1]} : vector<1x8x128xf32> to vector<1x8x32xf32>
    %43 = vector.extract_strided_slice %16 {offsets = [0, 0, 32], sizes = [1, 8, 32], strides = [1, 1, 1]} : vector<1x8x128xf32> to vector<1x8x32xf32>
    %44 = vector.extract_strided_slice %18 {offsets = [0, 0, 32], sizes = [1, 8, 32], strides = [1, 1, 1]} : vector<1x8x128xf32> to vector<1x8x32xf32>
    "tpu.trace_start"() <{level = 10 : i32, message = "bqd,bkd->bqk"}> : () -> ()
    %cst_15 = arith.constant dense<0.000000e+00> : vector<1x8x8xf32>
    %45 = tpu.matmul %42, %43, %cst_15 {dimension_numbers = #tpu.dot_dimension_numbers<[2], [2], [1], [1], [0, 0, 0, 1, 1, 1], [0], [0]>} : vector<1x8x32xf32>, vector<1x8x32xf32>, vector<1x8x8xf32> -> vector<1x8x8xf32>
    "tpu.trace_stop"() : () -> ()
    %cst_16 = arith.constant 2.000000e-01 : f32
    %46 = vector.broadcast %cst_16 : f32 to vector<1x8x8xf32>
    %47 = arith.mulf %45, %46 : vector<1x8x8xf32>
    %cst_17 = arith.constant dense<0xFF800000> : vector<1x8xf32>
    %48 = vector.multi_reduction <maximumf>, %47, %cst_17 [2] : vector<1x8x8xf32> to vector<1x8xf32>
    %49 = vector.shape_cast %48 : vector<1x8xf32> to vector<1x8x1xf32>
    %50 = vector.broadcast %49 : vector<1x8x1xf32> to vector<1x8x8xf32>
    %51 = arith.subf %47, %50 : vector<1x8x8xf32>
    %52 = math.exp %51 : vector<1x8x8xf32>
    %cst_18 = arith.constant dense<0.000000e+00> : vector<1x8xf32>
    %53 = vector.multi_reduction <add>, %52, %cst_18 [2] : vector<1x8x8xf32> to vector<1x8xf32>
    %54 = vector.shape_cast %53 : vector<1x8xf32> to vector<1x8x1xf32>
    %55 = tpu.reciprocal %54 {approx = true} : vector<1x8x1xf32> -> vector<1x8x1xf32>
    %56 = vector.broadcast %55 : vector<1x8x1xf32> to vector<1x8x8xf32>
    %57 = arith.mulf %52, %56 : vector<1x8x8xf32>
    "tpu.trace_start"() <{level = 10 : i32, message = "bqk,bkd->bqd"}> : () -> ()
    %cst_19 = arith.constant dense<0.000000e+00> : vector<1x8x32xf32>
    %58 = tpu.matmul %57, %44, %cst_19 {dimension_numbers = #tpu.dot_dimension_numbers<[2], [1], [1], [2], [0, 0, 0, 1, 1, 2], [0], [0]>} : vector<1x8x8xf32>, vector<1x8x32xf32>, vector<1x8x32xf32> -> vector<1x8x32xf32>
    "tpu.trace_stop"() : () -> ()
    %59 = vector.shape_cast %58 : vector<1x8x32xf32> to vector<8x32xf32>
    %60 = arith.truncf %59 : vector<8x32xf32> to vector<8x32xbf16>
    %c32 = arith.constant 32 : index
    %c0_20 = arith.constant 0 : index
    %61 = vector.load %arg4[%c32, %c0_20] : memref<128x128xbf16, #tpu.memory_space<vmem>>, vector<32x128xbf16>
    %cst_21 = arith.constant dense<0.000000e+00> : vector<8x128xf32>
    %62 = tpu.matmul %60, %61, %cst_21 {dimension_numbers = #tpu.dot_dimension_numbers<[1], [0], [0], [1], [0, 0, 1, 1], [], []>} : vector<8x32xbf16>, vector<32x128xbf16>, vector<8x128xf32> -> vector<8x128xf32>
    %63 = arith.addf %41, %62 : vector<8x128xf32>
    %64 = vector.extract_strided_slice %14 {offsets = [0, 0, 64], sizes = [1, 8, 32], strides = [1, 1, 1]} : vector<1x8x128xf32> to vector<1x8x32xf32>
    %65 = vector.extract_strided_slice %16 {offsets = [0, 0, 64], sizes = [1, 8, 32], strides = [1, 1, 1]} : vector<1x8x128xf32> to vector<1x8x32xf32>
    %66 = vector.extract_strided_slice %18 {offsets = [0, 0, 64], sizes = [1, 8, 32], strides = [1, 1, 1]} : vector<1x8x128xf32> to vector<1x8x32xf32>
    "tpu.trace_start"() <{level = 10 : i32, message = "bqd,bkd->bqk"}> : () -> ()
    %cst_22 = arith.constant dense<0.000000e+00> : vector<1x8x8xf32>
    %67 = tpu.matmul %64, %65, %cst_22 {dimension_numbers = #tpu.dot_dimension_numbers<[2], [2], [1], [1], [0, 0, 0, 1, 1, 1], [0], [0]>} : vector<1x8x32xf32>, vector<1x8x32xf32>, vector<1x8x8xf32> -> vector<1x8x8xf32>
    "tpu.trace_stop"() : () -> ()
    %cst_23 = arith.constant 2.000000e-01 : f32
    %68 = vector.broadcast %cst_23 : f32 to vector<1x8x8xf32>
    %69 = arith.mulf %67, %68 : vector<1x8x8xf32>
    %cst_24 = arith.constant dense<0xFF800000> : vector<1x8xf32>
    %70 = vector.multi_reduction <maximumf>, %69, %cst_24 [2] : vector<1x8x8xf32> to vector<1x8xf32>
    %71 = vector.shape_cast %70 : vector<1x8xf32> to vector<1x8x1xf32>
    %72 = vector.broadcast %71 : vector<1x8x1xf32> to vector<1x8x8xf32>
    %73 = arith.subf %69, %72 : vector<1x8x8xf32>
    %74 = math.exp %73 : vector<1x8x8xf32>
    %cst_25 = arith.constant dense<0.000000e+00> : vector<1x8xf32>
    %75 = vector.multi_reduction <add>, %74, %cst_25 [2] : vector<1x8x8xf32> to vector<1x8xf32>
    %76 = vector.shape_cast %75 : vector<1x8xf32> to vector<1x8x1xf32>
    %77 = tpu.reciprocal %76 {approx = true} : vector<1x8x1xf32> -> vector<1x8x1xf32>
    %78 = vector.broadcast %77 : vector<1x8x1xf32> to vector<1x8x8xf32>
    %79 = arith.mulf %74, %78 : vector<1x8x8xf32>
    "tpu.trace_start"() <{level = 10 : i32, message = "bqk,bkd->bqd"}> : () -> ()
    %cst_26 = arith.constant dense<0.000000e+00> : vector<1x8x32xf32>
    %80 = tpu.matmul %79, %66, %cst_26 {dimension_numbers = #tpu.dot_dimension_numbers<[2], [1], [1], [2], [0, 0, 0, 1, 1, 2], [0], [0]>} : vector<1x8x8xf32>, vector<1x8x32xf32>, vector<1x8x32xf32> -> vector<1x8x32xf32>
    "tpu.trace_stop"() : () -> ()
    %81 = vector.shape_cast %80 : vector<1x8x32xf32> to vector<8x32xf32>
    %82 = arith.truncf %81 : vector<8x32xf32> to vector<8x32xbf16>
    %c64 = arith.constant 64 : index
    %c0_27 = arith.constant 0 : index
    %83 = vector.load %arg4[%c64, %c0_27] : memref<128x128xbf16, #tpu.memory_space<vmem>>, vector<32x128xbf16>
    %cst_28 = arith.constant dense<0.000000e+00> : vector<8x128xf32>
    %84 = tpu.matmul %82, %83, %cst_28 {dimension_numbers = #tpu.dot_dimension_numbers<[1], [0], [0], [1], [0, 0, 1, 1], [], []>} : vector<8x32xbf16>, vector<32x128xbf16>, vector<8x128xf32> -> vector<8x128xf32>
    %85 = arith.addf %63, %84 : vector<8x128xf32>
    %86 = vector.extract_strided_slice %14 {offsets = [0, 0, 96], sizes = [1, 8, 32], strides = [1, 1, 1]} : vector<1x8x128xf32> to vector<1x8x32xf32>
    %87 = vector.extract_strided_slice %16 {offsets = [0, 0, 96], sizes = [1, 8, 32], strides = [1, 1, 1]} : vector<1x8x128xf32> to vector<1x8x32xf32>
    %88 = vector.extract_strided_slice %18 {offsets = [0, 0, 96], sizes = [1, 8, 32], strides = [1, 1, 1]} : vector<1x8x128xf32> to vector<1x8x32xf32>
    "tpu.trace_start"() <{level = 10 : i32, message = "bqd,bkd->bqk"}> : () -> ()
    %cst_29 = arith.constant dense<0.000000e+00> : vector<1x8x8xf32>
    %89 = tpu.matmul %86, %87, %cst_29 {dimension_numbers = #tpu.dot_dimension_numbers<[2], [2], [1], [1], [0, 0, 0, 1, 1, 1], [0], [0]>} : vector<1x8x32xf32>, vector<1x8x32xf32>, vector<1x8x8xf32> -> vector<1x8x8xf32>
    "tpu.trace_stop"() : () -> ()
    %cst_30 = arith.constant 2.000000e-01 : f32
    %90 = vector.broadcast %cst_30 : f32 to vector<1x8x8xf32>
    %91 = arith.mulf %89, %90 : vector<1x8x8xf32>
    %cst_31 = arith.constant dense<0xFF800000> : vector<1x8xf32>
    %92 = vector.multi_reduction <maximumf>, %91, %cst_31 [2] : vector<1x8x8xf32> to vector<1x8xf32>
    %93 = vector.shape_cast %92 : vector<1x8xf32> to vector<1x8x1xf32>
    %94 = vector.broadcast %93 : vector<1x8x1xf32> to vector<1x8x8xf32>
    %95 = arith.subf %91, %94 : vector<1x8x8xf32>
    %96 = math.exp %95 : vector<1x8x8xf32>
    %cst_32 = arith.constant dense<0.000000e+00> : vector<1x8xf32>
    %97 = vector.multi_reduction <add>, %96, %cst_32 [2] : vector<1x8x8xf32> to vector<1x8xf32>
    %98 = vector.shape_cast %97 : vector<1x8xf32> to vector<1x8x1xf32>
    %99 = tpu.reciprocal %98 {approx = true} : vector<1x8x1xf32> -> vector<1x8x1xf32>
    %100 = vector.broadcast %99 : vector<1x8x1xf32> to vector<1x8x8xf32>
    %101 = arith.mulf %96, %100 : vector<1x8x8xf32>
    "tpu.trace_start"() <{level = 10 : i32, message = "bqk,bkd->bqd"}> : () -> ()
    %cst_33 = arith.constant dense<0.000000e+00> : vector<1x8x32xf32>
    %102 = tpu.matmul %101, %88, %cst_33 {dimension_numbers = #tpu.dot_dimension_numbers<[2], [1], [1], [2], [0, 0, 0, 1, 1, 2], [0], [0]>} : vector<1x8x8xf32>, vector<1x8x32xf32>, vector<1x8x32xf32> -> vector<1x8x32xf32>
    "tpu.trace_stop"() : () -> ()
    %103 = vector.shape_cast %102 : vector<1x8x32xf32> to vector<8x32xf32>
    %104 = arith.truncf %103 : vector<8x32xf32> to vector<8x32xbf16>
    %c96 = arith.constant 96 : index
    %c0_34 = arith.constant 0 : index
    %105 = vector.load %arg4[%c96, %c0_34] : memref<128x128xbf16, #tpu.memory_space<vmem>>, vector<32x128xbf16>
    %cst_35 = arith.constant dense<0.000000e+00> : vector<8x128xf32>
    %106 = tpu.matmul %104, %105, %cst_35 {dimension_numbers = #tpu.dot_dimension_numbers<[1], [0], [0], [1], [0, 0, 1, 1], [], []>} : vector<8x32xbf16>, vector<32x128xbf16>, vector<8x128xf32> -> vector<8x128xf32>
    %107 = arith.addf %85, %106 : vector<8x128xf32>
    %c0_36 = arith.constant 0 : index
    %c0_37 = arith.constant 0 : index
    %108 = vector.load %arg5[%c0_36, %c0_37] : memref<1x128xf32, #tpu.memory_space<vmem>>, vector<1x128xf32>
    %109 = vector.broadcast %108 : vector<1x128xf32> to vector<8x128xf32>
    %110 = arith.addf %107, %109 : vector<8x128xf32>
    %111 = arith.addf %1, %110 : vector<8x128xf32>
    %c0_38 = arith.constant 0 : index
    %c0_39 = arith.constant 0 : index
    %112 = vector.load %arg6[%c0_38, %c0_39] : memref<1x128xf32, #tpu.memory_space<vmem>>, vector<1x128xf32>
    %c0_40 = arith.constant 0 : index
    %c0_41 = arith.constant 0 : index
    %113 = vector.load %arg7[%c0_40, %c0_41] : memref<1x128xf32, #tpu.memory_space<vmem>>, vector<1x128xf32>
    %cst_42 = arith.constant dense<0.000000e+00> : vector<8xf32>
    %114 = vector.multi_reduction <add>, %111, %cst_42 [1] : vector<8x128xf32> to vector<8xf32>
    %115 = vector.shape_cast %114 : vector<8xf32> to vector<8x1xf32>
    %cst_43 = arith.constant 0.00999999977 : f32
    %116 = vector.broadcast %cst_43 : f32 to vector<8x1xf32>
    %117 = arith.mulf %115, %116 : vector<8x1xf32>
    %118 = vector.broadcast %117 : vector<8x1xf32> to vector<8x128xf32>
    %119 = arith.subf %111, %118 : vector<8x128xf32>
    %120 = vector.broadcast %6 : vector<1x128xf32> to vector<8x128xf32>
    %121 = arith.mulf %119, %120 : vector<8x128xf32>
    %122 = arith.mulf %121, %121 : vector<8x128xf32>
    %cst_44 = arith.constant dense<0.000000e+00> : vector<8xf32>
    %123 = vector.multi_reduction <add>, %122, %cst_44 [1] : vector<8x128xf32> to vector<8xf32>
    %124 = vector.shape_cast %123 : vector<8xf32> to vector<8x1xf32>
    %cst_45 = arith.constant 0.00999999977 : f32
    %125 = vector.broadcast %cst_45 : f32 to vector<8x1xf32>
    %126 = arith.mulf %124, %125 : vector<8x1xf32>
    %cst_46 = arith.constant 9.99999974E-6 : f32
    %127 = vector.broadcast %cst_46 : f32 to vector<8x1xf32>
    %128 = arith.addf %126, %127 : vector<8x1xf32>
    %129 = math.rsqrt %128 : vector<8x1xf32>
    %130 = vector.broadcast %129 : vector<8x1xf32> to vector<8x128xf32>
    %131 = arith.mulf %121, %130 : vector<8x128xf32>
    %132 = vector.broadcast %112 : vector<1x128xf32> to vector<8x128xf32>
    %133 = arith.mulf %131, %132 : vector<8x128xf32>
    %134 = vector.broadcast %113 : vector<1x128xf32> to vector<8x128xf32>
    %135 = arith.addf %133, %134 : vector<8x128xf32>
    %136 = arith.truncf %135 : vector<8x128xf32> to vector<8x128xbf16>
    %c0_47 = arith.constant 0 : index
    %c0_48 = arith.constant 0 : index
    %137 = vector.load %arg8[%c0_47, %c0_48] : memref<128x256xbf16, #tpu.memory_space<vmem>>, vector<128x256xbf16>
    %cst_49 = arith.constant dense<0.000000e+00> : vector<8x256xf32>
    %138 = tpu.matmul %136, %137, %cst_49 {dimension_numbers = #tpu.dot_dimension_numbers<[1], [0], [0], [1], [0, 0, 1, 1], [], []>} : vector<8x128xbf16>, vector<128x256xbf16>, vector<8x256xf32> -> vector<8x256xf32>
    %c0_50 = arith.constant 0 : index
    %c0_51 = arith.constant 0 : index
    %139 = vector.load %arg9[%c0_50, %c0_51] : memref<1x256xf32, #tpu.memory_space<vmem>>, vector<1x256xf32>
    %140 = vector.broadcast %139 : vector<1x256xf32> to vector<8x256xf32>
    %141 = arith.addf %138, %140 : vector<8x256xf32>
    %cst_52 = arith.constant 0.000000e+00 : f32
    %142 = vector.broadcast %cst_52 : f32 to vector<8x256xf32>
    %143 = arith.cmpf oge, %141, %142 : vector<8x256xf32>
    %cst_53 = arith.constant 0.00999999977 : f32
    %144 = vector.broadcast %cst_53 : f32 to vector<8x256xf32>
    %145 = arith.mulf %144, %141 : vector<8x256xf32>
    %146 = arith.select %143, %141, %145 : vector<8x256xi1>, vector<8x256xf32>
    %147 = arith.truncf %146 : vector<8x256xf32> to vector<8x256xbf16>
    %c0_54 = arith.constant 0 : index
    %c0_55 = arith.constant 0 : index
    %148 = vector.load %arg10[%c0_54, %c0_55] : memref<256x128xbf16, #tpu.memory_space<vmem>>, vector<256x128xbf16>
    %cst_56 = arith.constant dense<0.000000e+00> : vector<8x128xf32>
    %149 = tpu.matmul %147, %148, %cst_56 {dimension_numbers = #tpu.dot_dimension_numbers<[1], [0], [0], [1], [0, 0, 1, 1], [], []>} : vector<8x256xbf16>, vector<256x128xbf16>, vector<8x128xf32> -> vector<8x128xf32>
    %c0_57 = arith.constant 0 : index
    %c0_58 = arith.constant 0 : index
    %150 = vector.load %arg11[%c0_57, %c0_58] : memref<1x128xf32, #tpu.memory_space<vmem>>, vector<1x128xf32>
    %151 = vector.broadcast %150 : vector<1x128xf32> to vector<8x128xf32>
    %152 = arith.addf %149, %151 : vector<8x128xf32>
    %153 = arith.addf %135, %152 : vector<8x128xf32>
    %c0_59 = arith.constant 0 : index
    %c0_60 = arith.constant 0 : index
    %154 = vector.load %arg12[%c0_59, %c0_60] : memref<1x128xf32, #tpu.memory_space<vmem>>, vector<1x128xf32>
    %c0_61 = arith.constant 0 : index
    %c0_62 = arith.constant 0 : index
    %155 = vector.load %arg13[%c0_61, %c0_62] : memref<1x128xf32, #tpu.memory_space<vmem>>, vector<1x128xf32>
    %cst_63 = arith.constant dense<0.000000e+00> : vector<8xf32>
    %156 = vector.multi_reduction <add>, %153, %cst_63 [1] : vector<8x128xf32> to vector<8xf32>
    %157 = vector.shape_cast %156 : vector<8xf32> to vector<8x1xf32>
    %cst_64 = arith.constant 0.00999999977 : f32
    %158 = vector.broadcast %cst_64 : f32 to vector<8x1xf32>
    %159 = arith.mulf %157, %158 : vector<8x1xf32>
    %160 = vector.broadcast %159 : vector<8x1xf32> to vector<8x128xf32>
    %161 = arith.subf %153, %160 : vector<8x128xf32>
    %162 = vector.broadcast %6 : vector<1x128xf32> to vector<8x128xf32>
    %163 = arith.mulf %161, %162 : vector<8x128xf32>
    %164 = arith.mulf %163, %163 : vector<8x128xf32>
    %cst_65 = arith.constant dense<0.000000e+00> : vector<8xf32>
    %165 = vector.multi_reduction <add>, %164, %cst_65 [1] : vector<8x128xf32> to vector<8xf32>
    %166 = vector.shape_cast %165 : vector<8xf32> to vector<8x1xf32>
    %cst_66 = arith.constant 0.00999999977 : f32
    %167 = vector.broadcast %cst_66 : f32 to vector<8x1xf32>
    %168 = arith.mulf %166, %167 : vector<8x1xf32>
    %cst_67 = arith.constant 9.99999974E-6 : f32
    %169 = vector.broadcast %cst_67 : f32 to vector<8x1xf32>
    %170 = arith.addf %168, %169 : vector<8x1xf32>
    %171 = math.rsqrt %170 : vector<8x1xf32>
    %172 = vector.broadcast %171 : vector<8x1xf32> to vector<8x128xf32>
    %173 = arith.mulf %163, %172 : vector<8x128xf32>
    %174 = vector.broadcast %154 : vector<1x128xf32> to vector<8x128xf32>
    %175 = arith.mulf %173, %174 : vector<8x128xf32>
    %176 = vector.broadcast %155 : vector<1x128xf32> to vector<8x128xf32>
    %177 = arith.addf %175, %176 : vector<8x128xf32>
    %178 = vector.shape_cast %177 : vector<8x128xf32> to vector<1x8x128xf32>
    %c0_68 = arith.constant 0 : index
    %c0_69 = arith.constant 0 : index
    %c0_70 = arith.constant 0 : index
    %179 = vector.load %arg14[%c0_68, %c0_69, %c0_70] : memref<1x8x128xf32, #tpu.memory_space<vmem>>, vector<1x8x128xf32>
    tpu.vector_store %arg14[%c0_68, %c0_69, %c0_70], %178 {strides = array<i32>} : memref<1x8x128xf32, #tpu.memory_space<vmem>>, vector<1x8x128xf32>,
    return
  }
  func.func @transform_0(%arg0: i32) -> (i32, i32, i32) {
    %c0_i32 = arith.constant 0 : i32
    %c0_i32_0 = arith.constant 0 : i32
    %c0_i32_1 = arith.constant 0 : i32
    return %arg0, %c0_i32, %c0_i32_0 : i32, i32, i32
  }
  func.func @transform_1(%arg0: i32) -> (i32, i32) {
    %c0_i32 = arith.constant 0 : i32
    %c0_i32_0 = arith.constant 0 : i32
    %c0_i32_1 = arith.constant 0 : i32
    return %c0_i32, %c0_i32_0 : i32, i32
  }
  func.func @transform_2(%arg0: i32) -> (i32, i32) {
    %c0_i32 = arith.constant 0 : i32
    %c0_i32_0 = arith.constant 0 : i32
    %c0_i32_1 = arith.constant 0 : i32
    return %c0_i32, %c0_i32_0 : i32, i32
  }
  func.func @transform_3(%arg0: i32) -> (i32, i32) {
    %c0_i32 = arith.constant 0 : i32
    %c0_i32_0 = arith.constant 0 : i32
    %c0_i32_1 = arith.constant 0 : i32
    return %c0_i32, %c0_i32_0 : i32, i32
  }
  func.func @transform_4(%arg0: i32) -> (i32, i32) {
    %c0_i32 = arith.constant 0 : i32
    %c0_i32_0 = arith.constant 0 : i32
    %c0_i32_1 = arith.constant 0 : i32
    return %c0_i32, %c0_i32_0 : i32, i32
  }
  func.func @transform_5(%arg0: i32) -> (i32, i32) {
    %c0_i32 = arith.constant 0 : i32
    %c0_i32_0 = arith.constant 0 : i32
    %c0_i32_1 = arith.constant 0 : i32
    return %c0_i32, %c0_i32_0 : i32, i32
  }
  func.func @transform_6(%arg0: i32) -> (i32, i32) {
    %c0_i32 = arith.constant 0 : i32
    %c0_i32_0 = arith.constant 0 : i32
    %c0_i32_1 = arith.constant 0 : i32
    return %c0_i32, %c0_i32_0 : i32, i32
  }
  func.func @transform_7(%arg0: i32) -> (i32, i32) {
    %c0_i32 = arith.constant 0 : i32
    %c0_i32_0 = arith.constant 0 : i32
    %c0_i32_1 = arith.constant 0 : i32
    return %c0_i32, %c0_i32_0 : i32, i32
  }
  func.func @transform_8(%arg0: i32) -> (i32, i32) {
    %c0_i32 = arith.constant 0 : i32
    %c0_i32_0 = arith.constant 0 : i32
    %c0_i32_1 = arith.constant 0 : i32
    return %c0_i32, %c0_i32_0 : i32, i32
  }
  func.func @transform_9(%arg0: i32) -> (i32, i32) {
    %c0_i32 = arith.constant 0 : i32
    %c0_i32_0 = arith.constant 0 : i32
    %c0_i32_1 = arith.constant 0 : i32
    return %c0_i32, %c0_i32_0 : i32, i32
  }
  func.func @transform_10(%arg0: i32) -> (i32, i32) {
    %c0_i32 = arith.constant 0 : i32
    %c0_i32_0 = arith.constant 0 : i32
    %c0_i32_1 = arith.constant 0 : i32
    return %c0_i32, %c0_i32_0 : i32, i32
  }
  func.func @transform_11(%arg0: i32) -> (i32, i32) {
    %c0_i32 = arith.constant 0 : i32
    %c0_i32_0 = arith.constant 0 : i32
    %c0_i32_1 = arith.constant 0 : i32
    return %c0_i32, %c0_i32_0 : i32, i32
  }
  func.func @transform_12(%arg0: i32) -> (i32, i32) {
    %c0_i32 = arith.constant 0 : i32
    %c0_i32_0 = arith.constant 0 : i32
    %c0_i32_1 = arith.constant 0 : i32
    return %c0_i32, %c0_i32_0 : i32, i32
  }
  func.func @transform_13(%arg0: i32) -> (i32, i32, i32) {
    %c0_i32 = arith.constant 0 : i32
    %c0_i32_0 = arith.constant 0 : i32
    %c0_i32_1 = arith.constant 0 : i32
    return %arg0, %c0_i32, %c0_i32_0 : i32, i32, i32
  }
}

</mosaic_0001>

<llo_original>
// kernel: tpu_custom_call.1
$region0: #{tpu_custom_call.1}
  #allocation0 [shape = 'u32[]', space=smem, size = 0x4, offset = 0x4, fixed_abs, tag = 'smem constant byte address 0x4 - core index']
  #allocation1 [shape = 'u32[144,128]{1,0:T(1,128)}', space=vmem, size = 0x12000, scoped, tag = 'internal scratch']
  %s0 = inlined_call_operand.hbm [shape: f32[2,8,128], index: 0, kind: input, shape index: {}]
  %s1 = inlined_call_operand.hbm [shape: bf16[128,384], index: 1, kind: input, shape index: {}]
  %s2 = inlined_call_operand.vmem [shape: f32[1,384], index: 2, kind: input, shape index: {}]
  %s3 = inlined_call_operand.hbm [shape: bf16[128,128], index: 3, kind: input, shape index: {}]
  %s4 = inlined_call_operand.vmem [shape: f32[1,128], index: 4, kind: input, shape index: {}]
  %s5 = inlined_call_operand.vmem [shape: f32[1,128], index: 5, kind: input, shape index: {}]
  %s6 = inlined_call_operand.vmem [shape: f32[1,128], index: 6, kind: input, shape index: {}]
  %s7 = inlined_call_operand.hbm [shape: bf16[128,256], index: 7, kind: input, shape index: {}]
  %s8 = inlined_call_operand.vmem [shape: f32[1,256], index: 8, kind: input, shape index: {}]
  %s9 = inlined_call_operand.hbm [shape: bf16[256,128], index: 9, kind: input, shape index: {}]
  %s10 = inlined_call_operand.vmem [shape: f32[1,128], index: 10, kind: input, shape index: {}]
  %s11 = inlined_call_operand.vmem [shape: f32[1,128], index: 11, kind: input, shape index: {}]
  %s12 = inlined_call_operand.vmem [shape: f32[1,128], index: 12, kind: input, shape index: {}]
  %s13 = inlined_call_operand.hbm [shape: f32[2,8,128], index: 13, kind: output, shape index: {}]
  %s14 = sld [smem:[#allocation0]]
  $region105: #{tpu_custom_call.1} parent=0
    _
  %s16 = ssub.s32 1, %s14
  %s17 = scalar_select 0, %s16, %s14
  $region1: #{tpu_custom_call.1} parent=0
    #allocation2 [shape = 'u8[8192]{0}', space=vmem, size = 0x2000, scoped, tag = 'input window, operand 0']
    #allocation3 [shape = 's32[2]{0}', space=sflag, size = 0x8, scoped, tag = 'scoped memory for tpu_custom_call.1']
    #allocation4 [shape = 's32[2]{0}', space=sflag, size = 0x8, scoped, tag = 'scoped memory for tpu_custom_call.1']
    #allocation5 [shape = 'u8[98304]{0}', space=vmem, size = 0x18000, scoped, tag = 'input window, operand 1, single buffered']
    #allocation6 [shape = 's32[1]{0}', space=sflag, size = 0x4, scoped, tag = 'scoped memory for tpu_custom_call.1']
    #allocation7 [shape = 'u8[32768]{0}', space=vmem, size = 0x8000, scoped, tag = 'input window, operand 3, single buffered']
    #allocation8 [shape = 'u8[65536]{0}', space=vmem, size = 0x10000, scoped, tag = 'input window, operand 7, single buffered']
    #allocation9 [shape = 's32[1]{0}', space=sflag, size = 0x4, scoped, tag = 'scoped memory for tpu_custom_call.1']
    #allocation10 [shape = 'u8[65536]{0}', space=vmem, size = 0x10000, scoped, tag = 'input window, operand 9, single buffered']
    #allocation11 [shape = 'u8[8192]{0}', space=vmem, size = 0x2000, scoped, tag = 'output window, operand 0']
    %18 = vsyncpa [#allocation3], 0
    %s19 = scalar_lea.sflag [#allocation3], 1
    %20 = vsyncpa %s19, 0
    %21 = vsyncpa [#allocation6], 0
    %22 = vsyncpa [#allocation9], 0
    %23 = vsyncpa [#allocation4], 0
    %s24 = scalar_lea.sflag [#allocation4], 1
    %25 = vsyncpa %s24, 0
    loop: start=0, step=1, limit=4
    $region2: #{tpu_custom_call.1} parent=1 // loop_pre_header
      _
    $region3: #{tpu_custom_call.1} parent=1 // loop_header
      %s27 = sphi 0, %s31
      %p28 = scmp.ge.s32.totalorder %s27, 4
      %s37 = sphi 0, %s39
      %s40 = sphi 0, %s37
      %s41 = sphi 0, %s40
      %s57 = sphi 0, %s41
      %s61 = sphi 0, %s61
      %s63 = sphi 0, %s61
      %s64 = sphi 0, %s63
      %s78 = sphi 0, %s64
      %s82 = sphi 0, %s82
      %s84 = sphi 0, %s82
      %s85 = sphi 0, %s84
      %s99 = sphi 0, %s85
      %s103 = sphi 0, %s103
      %s105 = sphi 0, %s103
      %s106 = sphi 0, %s105
      %s120 = sphi 0, %s106
      %s124 = sphi 0, %s124
      %s126 = sphi 0, %s124
      %s127 = sphi 0, %s126
      %s141 = sphi 0, %s127
      %s145 = sphi 0, %s145
      %s147 = sphi 0, %s145
      %s148 = sphi 0, %s147
      %s162 = sphi 0, %s148
      %s166 = sphi 0, %s166
      %s168 = sphi 0, %s166
      %s169 = sphi 0, %s168
      %s183 = sphi 0, %s169
      %s187 = sphi 0, %s187
      %s189 = sphi 0, %s187
      %s190 = sphi 0, %s189
      %s204 = sphi 0, %s190
      %s208 = sphi 0, %s208
      %s210 = sphi 0, %s208
      %s211 = sphi 0, %s210
      %s225 = sphi 0, %s211
      %s229 = sphi 0, %s229
      %s231 = sphi 0, %s229
      %s232 = sphi 0, %s231
      %s246 = sphi 0, %s232
      %s250 = sphi 0, %s250
      %s252 = sphi 0, %s250
      %s253 = sphi 0, %s252
      %s267 = sphi 0, %s253
      %s271 = sphi 0, %s271
      %s273 = sphi 0, %s271
      %s274 = sphi 0, %s273
      %s288 = sphi 0, %s274
      %s292 = sphi 0, %s292
      %s294 = sphi 0, %s292
      %s295 = sphi 0, %s294
      %s309 = sphi 0, %s295
      %s315 = sphi 0, %s317
      %s318 = sphi 0, %s315
      %s319 = sphi 0, %s318
      %s335 = sphi 0, %s319
    $region4: #{tpu_custom_call.1} parent=1 // loop_header_branch
      %30 = sbr.rel (%p28) target = $region8
    $region5: #{tpu_custom_call.1} parent=1 // loop_body
      %s32 = ssub.s32 %s27, 1
      %s33 = ssub.s32 %s27, 2
      %s34 = sadd.s32 %s27, 1
      %s35 = ssub.s32 %s27, %s34
      %p36 = scmp.eq.s32.totalorder %s35, 0
      %s38 = sadd.s32 %s37, 1
      %s39 = scalar_select %p36, %s37, %s38
      %p42 = pneg %p36
      %p43 = scmp.eq.s32.totalorder %s27, 1
      %p44 = por %p42, %p43
      %p45 = scmp.ne.s32.totalorder %s37, %s40
      %p46 = scmp.eq.s32.totalorder %s27, 0
      %p47 = por %p45, %p46
      %p48 = scmp.ne.s32.totalorder %s37, %s40
      %p49 = scmp.eq.s32.totalorder %s32, 1
      %p50 = por %p48, %p49
      %p51 = scmp.ne.s32.totalorder %s40, %s41
      %p52 = scmp.eq.s32.totalorder %s32, 0
      %p53 = por %p51, %p52
      %p54 = scmp.ne.s32.totalorder %s40, %s41
      %p55 = scmp.eq.s32.totalorder %s33, 1
      %p56 = por %p54, %p55
      %p58 = scmp.ne.s32.totalorder %s41, %s57
      %p59 = scmp.eq.s32.totalorder %s33, 0
      %p60 = por %p58, %p59
      %s62 = sadd.s32 %s61, 1
      %p65 = scmp.eq.s32.totalorder %s27, 1
      %p66 = scmp.ne.s32.totalorder %s61, %s63
      %p67 = scmp.eq.s32.totalorder %s27, 0
      %p68 = por %p66, %p67
      %p69 = scmp.ne.s32.totalorder %s61, %s63
      %p70 = scmp.eq.s32.totalorder %s32, 1
      %p71 = por %p69, %p70
      %p72 = scmp.ne.s32.totalorder %s63, %s64
      %p73 = scmp.eq.s32.totalorder %s32, 0
      %p74 = por %p72, %p73
      %p75 = scmp.ne.s32.totalorder %s63, %s64
      %p76 = scmp.eq.s32.totalorder %s33, 1
      %p77 = por %p75, %p76
      %p79 = scmp.ne.s32.totalorder %s64, %s78
      %p80 = scmp.eq.s32.totalorder %s33, 0
      %p81 = por %p79, %p80
      %s83 = sadd.s32 %s82, 1
      %p86 = scmp.eq.s32.totalorder %s27, 1
      %p87 = scmp.ne.s32.totalorder %s82, %s84
      %p88 = scmp.eq.s32.totalorder %s27, 0
      %p89 = por %p87, %p88
      %p90 = scmp.ne.s32.totalorder %s82, %s84
      %p91 = scmp.eq.s32.totalorder %s32, 1
      %p92 = por %p90, %p91
      %p93 = scmp.ne.s32.totalorder %s84, %s85
      %p94 = scmp.eq.s32.totalorder %s32, 0
      %p95 = por %p93, %p94
      %p96 = scmp.ne.s32.totalorder %s84, %s85
      %p97 = scmp.eq.s32.totalorder %s33, 1
      %p98 = por %p96, %p97
      %p100 = scmp.ne.s32.totalorder %s85, %s99
      %p101 = scmp.eq.s32.totalorder %s33, 0
      %p102 = por %p100, %p101
      %s104 = sadd.s32 %s103, 1
      %p107 = scmp.eq.s32.totalorder %s27, 1
      %p108 = scmp.ne.s32.totalorder %s103, %s105
      %p109 = scmp.eq.s32.totalorder %s27, 0
      %p110 = por %p108, %p109
      %p111 = scmp.ne.s32.totalorder %s103, %s105
      %p112 = scmp.eq.s32.totalorder %s32, 1
      %p113 = por %p111, %p112
      %p114 = scmp.ne.s32.totalorder %s105, %s106
      %p115 = scmp.eq.s32.totalorder %s32, 0
      %p116 = por %p114, %p115
      %p117 = scmp.ne.s32.totalorder %s105, %s106
      %p118 = scmp.eq.s32.totalorder %s33, 1
      %p119 = por %p117, %p118
      %p121 = scmp.ne.s32.totalorder %s106, %s120
      %p122 = scmp.eq.s32.totalorder %s33, 0
      %p123 = por %p121, %p122
      %s125 = sadd.s32 %s124, 1
      %p128 = scmp.eq.s32.totalorder %s27, 1
      %p129 = scmp.ne.s32.totalorder %s124, %s126
      %p130 = scmp.eq.s32.totalorder %s27, 0
      %p131 = por %p129, %p130
      %p132 = scmp.ne.s32.totalorder %s124, %s126
      %p133 = scmp.eq.s32.totalorder %s32, 1
      %p134 = por %p132, %p133
      %p135 = scmp.ne.s32.totalorder %s126, %s127
      %p136 = scmp.eq.s32.totalorder %s32, 0
      %p137 = por %p135, %p136
      %p138 = scmp.ne.s32.totalorder %s126, %s127
      %p139 = scmp.eq.s32.totalorder %s33, 1
      %p140 = por %p138, %p139
      %p142 = scmp.ne.s32.totalorder %s127, %s141
      %p143 = scmp.eq.s32.totalorder %s33, 0
      %p144 = por %p142, %p143
      %s146 = sadd.s32 %s145, 1
      %p149 = scmp.eq.s32.totalorder %s27, 1
      %p150 = scmp.ne.s32.totalorder %s145, %s147
      %p151 = scmp.eq.s32.totalorder %s27, 0
      %p152 = por %p150, %p151
      %p153 = scmp.ne.s32.totalorder %s145, %s147
      %p154 = scmp.eq.s32.totalorder %s32, 1
      %p155 = por %p153, %p154
      %p156 = scmp.ne.s32.totalorder %s147, %s148
      %p157 = scmp.eq.s32.totalorder %s32, 0
      %p158 = por %p156, %p157
      %p159 = scmp.ne.s32.totalorder %s147, %s148
      %p160 = scmp.eq.s32.totalorder %s33, 1
      %p161 = por %p159, %p160
      %p163 = scmp.ne.s32.totalorder %s148, %s162
      %p164 = scmp.eq.s32.totalorder %s33, 0
      %p165 = por %p163, %p164
      %s167 = sadd.s32 %s166, 1
      %p170 = scmp.eq.s32.totalorder %s27, 1
      %p171 = scmp.ne.s32.totalorder %s166, %s168
      %p172 = scmp.eq.s32.totalorder %s27, 0
      %p173 = por %p171, %p172
      %p174 = scmp.ne.s32.totalorder %s166, %s168
      %p175 = scmp.eq.s32.totalorder %s32, 1
      %p176 = por %p174, %p175
      %p177 = scmp.ne.s32.totalorder %s168, %s169
      %p178 = scmp.eq.s32.totalorder %s32, 0
      %p179 = por %p177, %p178
      %p180 = scmp.ne.s32.totalorder %s168, %s169
      %p181 = scmp.eq.s32.totalorder %s33, 1
      %p182 = por %p180, %p181
      %p184 = scmp.ne.s32.totalorder %s169, %s183
      %p185 = scmp.eq.s32.totalorder %s33, 0
      %p186 = por %p184, %p185
      %s188 = sadd.s32 %s187, 1
      %p191 = scmp.eq.s32.totalorder %s27, 1
      %p192 = scmp.ne.s32.totalorder %s187, %s189
      %p193 = scmp.eq.s32.totalorder %s27, 0
      %p194 = por %p192, %p193
      %p195 = scmp.ne.s32.totalorder %s187, %s189
      %p196 = scmp.eq.s32.totalorder %s32, 1
      %p197 = por %p195, %p196
      %p198 = scmp.ne.s32.totalorder %s189, %s190
      %p199 = scmp.eq.s32.totalorder %s32, 0
      %p200 = por %p198, %p199
      %p201 = scmp.ne.s32.totalorder %s189, %s190
      %p202 = scmp.eq.s32.totalorder %s33, 1
      %p203 = por %p201, %p202
      %p205 = scmp.ne.s32.totalorder %s190, %s204
      %p206 = scmp.eq.s32.totalorder %s33, 0
      %p207 = por %p205, %p206
      %s209 = sadd.s32 %s208, 1
      %p212 = scmp.eq.s32.totalorder %s27, 1
      %p213 = scmp.ne.s32.totalorder %s208, %s210
      %p214 = scmp.eq.s32.totalorder %s27, 0
      %p215 = por %p213, %p214
      %p216 = scmp.ne.s32.totalorder %s208, %s210
      %p217 = scmp.eq.s32.totalorder %s32, 1
      %p218 = por %p216, %p217
      %p219 = scmp.ne.s32.totalorder %s210, %s211
      %p220 = scmp.eq.s32.totalorder %s32, 0
      %p221 = por %p219, %p220
      %p222 = scmp.ne.s32.totalorder %s210, %s211
      %p223 = scmp.eq.s32.totalorder %s33, 1
      %p224 = por %p222, %p223
      %p226 = scmp.ne.s32.totalorder %s211, %s225
      %p227 = scmp.eq.s32.totalorder %s33, 0
      %p228 = por %p226, %p227
      %s230 = sadd.s32 %s229, 1
      %p233 = scmp.eq.s32.totalorder %s27, 1
      %p234 = scmp.ne.s32.totalorder %s229, %s231
      %p235 = scmp.eq.s32.totalorder %s27, 0
      %p236 = por %p234, %p235
      %p237 = scmp.ne.s32.totalorder %s229, %s231
      %p238 = scmp.eq.s32.totalorder %s32, 1
      %p239 = por %p237, %p238
      %p240 = scmp.ne.s32.totalorder %s231, %s232
      %p241 = scmp.eq.s32.totalorder %s32, 0
      %p242 = por %p240, %p241
      %p243 = scmp.ne.s32.totalorder %s231, %s232
      %p244 = scmp.eq.s32.totalorder %s33, 1
      %p245 = por %p243, %p244
      %p247 = scmp.ne.s32.totalorder %s232, %s246
      %p248 = scmp.eq.s32.totalorder %s33, 0
      %p249 = por %p247, %p248
      %s251 = sadd.s32 %s250, 1
      %p254 = scmp.eq.s32.totalorder %s27, 1
      %p255 = scmp.ne.s32.totalorder %s250, %s252
      %p256 = scmp.eq.s32.totalorder %s27, 0
      %p257 = por %p255, %p256
      %p258 = scmp.ne.s32.totalorder %s250, %s252
      %p259 = scmp.eq.s32.totalorder %s32, 1
      %p260 = por %p258, %p259
      %p261 = scmp.ne.s32.totalorder %s252, %s253
      %p262 = scmp.eq.s32.totalorder %s32, 0
      %p263 = por %p261, %p262
      %p264 = scmp.ne.s32.totalorder %s252, %s253
      %p265 = scmp.eq.s32.totalorder %s33, 1
      %p266 = por %p264, %p265
      %p268 = scmp.ne.s32.totalorder %s253, %s267
      %p269 = scmp.eq.s32.totalorder %s33, 0
      %p270 = por %p268, %p269
      %s272 = sadd.s32 %s271, 1
      %p275 = scmp.eq.s32.totalorder %s27, 1
      %p276 = scmp.ne.s32.totalorder %s271, %s273
      %p277 = scmp.eq.s32.totalorder %s27, 0
      %p278 = por %p276, %p277
      %p279 = scmp.ne.s32.totalorder %s271, %s273
      %p280 = scmp.eq.s32.totalorder %s32, 1
      %p281 = por %p279, %p280
      %p282 = scmp.ne.s32.totalorder %s273, %s274
      %p283 = scmp.eq.s32.totalorder %s32, 0
      %p284 = por %p282, %p283
      %p285 = scmp.ne.s32.totalorder %s273, %s274
      %p286 = scmp.eq.s32.totalorder %s33, 1
      %p287 = por %p285, %p286
      %p289 = scmp.ne.s32.totalorder %s274, %s288
      %p290 = scmp.eq.s32.totalorder %s33, 0
      %p291 = por %p289, %p290
      %s293 = sadd.s32 %s292, 1
      %p296 = scmp.eq.s32.totalorder %s27, 1
      %p297 = scmp.ne.s32.totalorder %s292, %s294
      %p298 = scmp.eq.s32.totalorder %s27, 0
      %p299 = por %p297, %p298
      %p300 = scmp.ne.s32.totalorder %s292, %s294
      %p301 = scmp.eq.s32.totalorder %s32, 1
      %p302 = por %p300, %p301
      %p303 = scmp.ne.s32.totalorder %s294, %s295
      %p304 = scmp.eq.s32.totalorder %s32, 0
      %p305 = por %p303, %p304
      %p306 = scmp.ne.s32.totalorder %s294, %s295
      %p307 = scmp.eq.s32.totalorder %s33, 1
      %p308 = por %p306, %p307
      %p310 = scmp.ne.s32.totalorder %s295, %s309
      %p311 = scmp.eq.s32.totalorder %s33, 0
      %p312 = por %p310, %p311
      %s313 = ssub.s32 %s27, %s34
      %p314 = scmp.eq.s32.totalorder %s313, 0
      %s316 = sadd.s32 %s315, 1
      %s317 = scalar_select %p314, %s315, %s316
      %p320 = pneg %p314
      %p321 = scmp.eq.s32.totalorder %s27, 1
      %p322 = por %p320, %p321
      %p323 = scmp.ne.s32.totalorder %s315, %s318
      %p324 = scmp.eq.s32.totalorder %s27, 0
      %p325 = por %p323, %p324
      %p326 = scmp.ne.s32.totalorder %s315, %s318
      %p327 = scmp.eq.s32.totalorder %s32, 1
      %p328 = por %p326, %p327
      %p329 = scmp.ne.s32.totalorder %s318, %s319
      %p330 = scmp.eq.s32.totalorder %s32, 0
      %p331 = por %p329, %p330
      %p332 = scmp.ne.s32.totalorder %s318, %s319
      %p333 = scmp.eq.s32.totalorder %s33, 1
      %p334 = por %p332, %p333
      %p336 = scmp.ne.s32.totalorder %s319, %s335
      %p337 = scmp.eq.s32.totalorder %s33, 0
      %p338 = por %p336, %p337
      %p339 = scmp.le.s32.totalorder 1, %s27
      %p340 = scmp.lt.s32.totalorder %s27, 3
      %p341 = pnand %p339, %p340
      %p342 = pneg %p341
      // Predicated region
      $region9: #{tpu_custom_call.1} parent=5 // pred_check
        _
      $region10: #{tpu_custom_call.1} parent=5 // pred_check_branch
        %344 = sbr.rel (%p341) target = $region12
      $region11: #{tpu_custom_call.1} parent=5 // pred_region
        %s345 = ssub.s32 %s27, 1
        // Predicated region
        $region13: #{tpu_custom_call.1} parent=11 // pred_check
          %p346 = pneg %p74
        $region14: #{tpu_custom_call.1} parent=11 // pred_check_branch
          %348 = sbr.rel (%p346) target = $region16
        $region15: #{tpu_custom_call.1} parent=11 // pred_region
          %s350 = ssub.s32 3072, 3072
          %351 = vsyncadd [#allocation6], %s350
          %s352 = sshll.u32 [#allocation5], 4
          %s353 = int_to_ptr.vmem [resolvable:$true] %s352
          %358 = dma.hbm_to_vmem [thread:$0]  %s1, 3072, %s353, [#allocation6], 192, 192, 12
        $region16: #{tpu_custom_call.1} parent=11 // pred_fallthru
          _
        // Predicated region
        $region17: #{tpu_custom_call.1} parent=11 // pred_check
          %p359 = pneg %p95
        $region18: #{tpu_custom_call.1} parent=11 // pred_check_branch
          %361 = sbr.rel (%p359) target = $region20
        $region19: #{tpu_custom_call.1} parent=11 // pred_region
          _
        $region20: #{tpu_custom_call.1} parent=11 // pred_fallthru
          _
        // Predicated region
        $region21: #{tpu_custom_call.1} parent=11 // pred_check
          %p362 = pneg %p116
        $region22: #{tpu_custom_call.1} parent=11 // pred_check_branch
          %364 = sbr.rel (%p362) target = $region24
        $region23: #{tpu_custom_call.1} parent=11 // pred_region
          %s366 = ssub.s32 1024, 1024
          %367 = vsyncadd [#allocation6], %s366
          %s368 = sshll.u32 [#allocation7], 4
          %s369 = int_to_ptr.vmem [resolvable:$true] %s368
          %374 = dma.hbm_to_vmem [thread:$0]  %s3, 1024, %s369, [#allocation6], 64, 64, 4
        $region24: #{tpu_custom_call.1} parent=11 // pred_fallthru
          _
        // Predicated region
        $region25: #{tpu_custom_call.1} parent=11 // pred_check
          %p375 = pneg %p137
        $region26: #{tpu_custom_call.1} parent=11 // pred_check_branch
          %377 = sbr.rel (%p375) target = $region28
        $region27: #{tpu_custom_call.1} parent=11 // pred_region
          _
        $region28: #{tpu_custom_call.1} parent=11 // pred_fallthru
          _
        // Predicated region
        $region29: #{tpu_custom_call.1} parent=11 // pred_check
          %p378 = pneg %p158
        $region30: #{tpu_custom_call.1} parent=11 // pred_check_branch
          %380 = sbr.rel (%p378) target = $region32
        $region31: #{tpu_custom_call.1} parent=11 // pred_region
          _
        $region32: #{tpu_custom_call.1} parent=11 // pred_fallthru
          _
        // Predicated region
        $region33: #{tpu_custom_call.1} parent=11 // pred_check
          %p381 = pneg %p179
        $region34: #{tpu_custom_call.1} parent=11 // pred_check_branch
          %383 = sbr.rel (%p381) target = $region36
        $region35: #{tpu_custom_call.1} parent=11 // pred_region
          _
        $region36: #{tpu_custom_call.1} parent=11 // pred_fallthru
          _
        // Predicated region
        $region37: #{tpu_custom_call.1} parent=11 // pred_check
          %p384 = pneg %p200
        $region38: #{tpu_custom_call.1} parent=11 // pred_check_branch
          %386 = sbr.rel (%p384) target = $region40
        $region39: #{tpu_custom_call.1} parent=11 // pred_region
          %s388 = ssub.s32 2048, 2048
          %389 = vsyncadd [#allocation9], %s388
          %s390 = sshll.u32 [#allocation8], 4
          %s391 = int_to_ptr.vmem [resolvable:$true] %s390
          %396 = dma.hbm_to_vmem [thread:$0]  %s7, 2048, %s391, [#allocation9], 128, 128, 8
        $region40: #{tpu_custom_call.1} parent=11 // pred_fallthru
          _
        // Predicated region
        $region41: #{tpu_custom_call.1} parent=11 // pred_check
          %p397 = pneg %p221
        $region42: #{tpu_custom_call.1} parent=11 // pred_check_branch
          %399 = sbr.rel (%p397) target = $region44
        $region43: #{tpu_custom_call.1} parent=11 // pred_region
          _
        $region44: #{tpu_custom_call.1} parent=11 // pred_fallthru
          _
        // Predicated region
        $region45: #{tpu_custom_call.1} parent=11 // pred_check
          %p400 = pneg %p242
        $region46: #{tpu_custom_call.1} parent=11 // pred_check_branch
          %402 = sbr.rel (%p400) target = $region48
        $region47: #{tpu_custom_call.1} parent=11 // pred_region
          %s404 = ssub.s32 2048, 2048
          %405 = vsyncadd [#allocation9], %s404
          %s406 = sshll.u32 [#allocation10], 4
          %s407 = int_to_ptr.vmem [resolvable:$true] %s406
          %412 = dma.hbm_to_vmem [thread:$0]  %s9, 2048, %s407, [#allocation9], 64, 64, 4
        $region48: #{tpu_custom_call.1} parent=11 // pred_fallthru
          _
        // Predicated region
        $region49: #{tpu_custom_call.1} parent=11 // pred_check
          %p413 = pneg %p263
        $region50: #{tpu_custom_call.1} parent=11 // pred_check_branch
          %415 = sbr.rel (%p413) target = $region52
        $region51: #{tpu_custom_call.1} parent=11 // pred_region
          _
        $region52: #{tpu_custom_call.1} parent=11 // pred_fallthru
          _
        // Predicated region
        $region53: #{tpu_custom_call.1} parent=11 // pred_check
          %p416 = pneg %p284
        $region54: #{tpu_custom_call.1} parent=11 // pred_check_branch
          %418 = sbr.rel (%p416) target = $region56
        $region55: #{tpu_custom_call.1} parent=11 // pred_region
          _
        $region56: #{tpu_custom_call.1} parent=11 // pred_fallthru
          _
        // Predicated region
        $region57: #{tpu_custom_call.1} parent=11 // pred_check
          %p419 = pneg %p305
        $region58: #{tpu_custom_call.1} parent=11 // pred_check_branch
          %421 = sbr.rel (%p419) target = $region60
        $region59: #{tpu_custom_call.1} parent=11 // pred_region
          _
        $region60: #{tpu_custom_call.1} parent=11 // pred_fallthru
          _
      $region12: #{tpu_custom_call.1} parent=5 // pred_fallthru
        _
      %p422 = scmp.lt.s32.totalorder %s27, 2
      // Predicated region
      $region61: #{tpu_custom_call.1} parent=5 // pred_check
        %p423 = pneg %p422
      $region62: #{tpu_custom_call.1} parent=5 // pred_check_branch
        %425 = sbr.rel (%p423) target = $region64
      $region63: #{tpu_custom_call.1} parent=5 // pred_region
        // Predicated region
        $region65: #{tpu_custom_call.1} parent=63 // pred_check
          %p426 = pneg %p47
        $region66: #{tpu_custom_call.1} parent=63 // pred_check_branch
          %428 = sbr.rel (%p426) target = $region68
        $region67: #{tpu_custom_call.1} parent=63 // pred_region
          %s429 = sand.u32 %s37, 1
          %s430 = scalar_lea.sflag [#allocation3], %s429
          %s431 = sand.u32 %s37, 1
          %s432 = smul.addr %s431, 8
          %s433 = scalar_lea.vmem [#allocation2], %s432
          %s435 = ssub.s32 128, 128
          %436 = vsyncadd %s430, %s435
          %s437 = smul.addr %s27, 128
          %s438 = scalar_lea.hbm %s0, %s437
          %s440 = sshll.u32 %s433, 4
          %s441 = int_to_ptr.vmem [resolvable:$true] %s440
          %443 = dma.hbm_to_vmem [thread:$0]  %s438, 128, %s441, %s430
        $region68: #{tpu_custom_call.1} parent=63 // pred_fallthru
          _
      $region64: #{tpu_custom_call.1} parent=5 // pred_fallthru
        _
      %p444 = scmp.le.s32.totalorder 1, %s27
      %p445 = scmp.lt.s32.totalorder %s27, 3
      %p446 = pnand %p444, %p445
      %p447 = pneg %p446
      // Predicated region
      $region69: #{tpu_custom_call.1} parent=5 // pred_check
        _
      $region70: #{tpu_custom_call.1} parent=5 // pred_check_branch
        %449 = sbr.rel (%p446) target = $region72
      $region71: #{tpu_custom_call.1} parent=5 // pred_region
        %s450 = ssub.s32 %s27, 1
        %s451 = sand.u32 %s40, 1
        %s452 = scalar_lea.sflag [#allocation3], %s451
        %s453 = sand.u32 %s40, 1
        %s454 = smul.addr %s453, 8
        %s455 = scalar_lea.vmem [#allocation2], %s454
        // Predicated region
        $region73: #{tpu_custom_call.1} parent=71 // pred_check
          %p456 = pneg %p53
        $region74: #{tpu_custom_call.1} parent=71 // pred_check_branch
          %458 = sbr.rel (%p456) target = $region76
        $region75: #{tpu_custom_call.1} parent=71 // pred_region
          %459 = dma.done %s452, 128
        $region76: #{tpu_custom_call.1} parent=71 // pred_fallthru
          _
        // Predicated region
        $region77: #{tpu_custom_call.1} parent=71 // pred_check
          %p460 = pneg %p74
        $region78: #{tpu_custom_call.1} parent=71 // pred_check_branch
          %462 = sbr.rel (%p460) target = $region80
        $region79: #{tpu_custom_call.1} parent=71 // pred_region
          %463 = dma.done [#allocation6], 3072
        $region80: #{tpu_custom_call.1} parent=71 // pred_fallthru
          _
        // Predicated region
        $region81: #{tpu_custom_call.1} parent=71 // pred_check
          %p464 = pneg %p116
        $region82: #{tpu_custom_call.1} parent=71 // pred_check_branch
          %466 = sbr.rel (%p464) target = $region84
        $region83: #{tpu_custom_call.1} parent=71 // pred_region
          %467 = dma.done [#allocation6], 1024
        $region84: #{tpu_custom_call.1} parent=71 // pred_fallthru
          _
        // Predicated region
        $region85: #{tpu_custom_call.1} parent=71 // pred_check
          %p468 = pneg %p200
        $region86: #{tpu_custom_call.1} parent=71 // pred_check_branch
          %470 = sbr.rel (%p468) target = $region88
        $region87: #{tpu_custom_call.1} parent=71 // pred_region
          %471 = dma.done [#allocation9], 2048
        $region88: #{tpu_custom_call.1} parent=71 // pred_fallthru
          _
        // Predicated region
        $region89: #{tpu_custom_call.1} parent=71 // pred_check
          %p472 = pneg %p242
        $region90: #{tpu_custom_call.1} parent=71 // pred_check_branch
          %474 = sbr.rel (%p472) target = $region92
        $region91: #{tpu_custom_call.1} parent=71 // pred_region
          %475 = dma.done [#allocation9], 2048
        $region92: #{tpu_custom_call.1} parent=71 // pred_fallthru
          _
        %s476 = sand.u32 %s40, 1
        %s477 = scalar_lea.sflag [#allocation3], %s476
        %s478 = sand.u32 %s40, 1
        %s479 = smul.addr %s478, 8
        %s480 = scalar_lea.vmem [#allocation2], %s479
        %p481 = pneg %p53
        %p482 = pneg %p50
        %p483 = pneg %p74
        %p484 = pneg %p71
        %p485 = pneg %p95
        %p486 = pneg %p92
        %p487 = pneg %p116
        %p488 = pneg %p113
        %p489 = pneg %p137
        %p490 = pneg %p134
        %p491 = pneg %p158
        %p492 = pneg %p155
        %p493 = pneg %p179
        %p494 = pneg %p176
        %p495 = pneg %p200
        %p496 = pneg %p197
        %p497 = pneg %p221
        %p498 = pneg %p218
        %p499 = pneg %p242
        %p500 = pneg %p239
        %p501 = pneg %p263
        %p502 = pneg %p260
        %p503 = pneg %p284
        %p504 = pneg %p281
        %p505 = pneg %p305
        %p506 = pneg %p302
        %p507 = pneg %p331
        %p508 = pneg %p328
        %s509 = sand.u32 %s318, 1
        %s510 = scalar_lea.sflag [#allocation4], %s509
        %s511 = sand.u32 %s318, 1
        %s512 = smul.addr %s511, 8
        %s513 = scalar_lea.vmem [#allocation11], %s512
        %v515 = vld [vmem:[%s455] sm:$0xff]
        %v516 = vlaneseq
        %v517 = vand.u32 %v516, 127
        %vm518 = vcmp.lt.s32.totalorder %v517, 100
        %v519 = vsel %vm518, 1, 0
        %v520 = vcvt.s32.f32 %v519
        %v521 = vpack.c.bf16 %v515, %v515
        %v522 = vld [vmem:[#allocation5] sm:$0xff]
        %v523 = vld [vmem:[#allocation5 + $0x8] sm:$0xf]
        %v524 = vld [vmem:[#allocation5 + $0xc] sm:$0xff]
        %v525 = vld [vmem:[#allocation5 + $0x14] sm:$0xf]
        %v526 = vld [vmem:[#allocation5 + $0x18] sm:$0xff]
        %v527 = vld [vmem:[#allocation5 + $0x20] sm:$0xf]
        %v528 = vld [vmem:[#allocation5 + $0x24] sm:$0xff]
        %v529 = vld [vmem:[#allocation5 + $0x2c] sm:$0xf]
        %v530 = vld [vmem:[#allocation5 + $0x30] sm:$0xff]
        %v531 = vld [vmem:[#allocation5 + $0x38] sm:$0xf]
        %v532 = vld [vmem:[#allocation5 + $0x3c] sm:$0xff]
        %v533 = vld [vmem:[#allocation5 + $0x44] sm:$0xf]
        %v534 = vld [vmem:[#allocation5 + $0x48] sm:$0xff]
        %v535 = vld [vmem:[#allocation5 + $0x50] sm:$0xf]
        %v536 = vld [vmem:[#allocation5 + $0x54] sm:$0xff]
        %v537 = vld [vmem:[#allocation5 + $0x5c] sm:$0xf]
        %v538 = vld [vmem:[#allocation5 + $0x60] sm:$0xff]
        %v539 = vld [vmem:[#allocation5 + $0x68] sm:$0xf]
        %v540 = vld [vmem:[#allocation5 + $0x6c] sm:$0xff]
        %v541 = vld [vmem:[#allocation5 + $0x74] sm:$0xf]
        %v542 = vld [vmem:[#allocation5 + $0x78] sm:$0xff]
        %v543 = vld [vmem:[#allocation5 + $0x80] sm:$0xf]
        %v544 = vld [vmem:[#allocation5 + $0x84] sm:$0xff]
        %v545 = vld [vmem:[#allocation5 + $0x8c] sm:$0xf]
        %v546 = vld [vmem:[#allocation5 + $0x90] sm:$0xff]
        %v547 = vld [vmem:[#allocation5 + $0x98] sm:$0xf]
        %v548 = vld [vmem:[#allocation5 + $0x9c] sm:$0xff]
        %v549 = vld [vmem:[#allocation5 + $0xa4] sm:$0xf]
        %v550 = vld [vmem:[#allocation5 + $0xa8] sm:$0xff]
        %v551 = vld [vmem:[#allocation5 + $0xb0] sm:$0xf]
        %v552 = vld [vmem:[#allocation5 + $0xb4] sm:$0xff]
        %v553 = vld [vmem:[#allocation5 + $0xbc] sm:$0xf]
        %v554 = vld [vmem:[%s2] sm:$0x7]
        %v556 = vlaneseq
        %v557 = vshrl.u32 %v556, 7
        %v558 = vsub.s32 0, %v557
        %v559 = vrot.slane %v554, %v558
        %v560 = vlaneseq
        %v561 = vshrl.u32 %v560, 7
        %v562 = vsub.s32 1, %v561
        %v563 = vrot.slane %v554, %v562
        %v564 = vlaneseq
        %v565 = vshrl.u32 %v564, 7
        %v566 = vsub.s32 2, %v565
        %v567 = vrot.slane %v554, %v566
        %v603 = vunpack.c.l.b16 %v522
        %v604 = vunpack.c.h.b16 %v522
        %v605 = vunpack.c.l.b16 %v523
        %v606 = vunpack.c.l.b16 %v524
        %v607 = vunpack.c.h.b16 %v524
        %v608 = vunpack.c.l.b16 %v525
        %v609 = vunpack.c.l.b16 %v526
        %v610 = vunpack.c.h.b16 %v526
        %v611 = vunpack.c.l.b16 %v527
        %v612 = vunpack.c.l.b16 %v528
        %v613 = vunpack.c.h.b16 %v528
        %v614 = vunpack.c.l.b16 %v529
        %v615 = vunpack.c.l.b16 %v530
        %v616 = vunpack.c.h.b16 %v530
        %v617 = vunpack.c.l.b16 %v531
        %v618 = vunpack.c.l.b16 %v532
        %v619 = vunpack.c.h.b16 %v532
        %v620 = vunpack.c.l.b16 %v533
        %v621 = vunpack.c.l.b16 %v534
        %v622 = vunpack.c.h.b16 %v534
        %v623 = vunpack.c.l.b16 %v535
        %v624 = vunpack.c.l.b16 %v536
        %v625 = vunpack.c.h.b16 %v536
        %v626 = vunpack.c.l.b16 %v537
        %v627 = vunpack.c.l.b16 %v538
        %v628 = vunpack.c.h.b16 %v538
        %v629 = vunpack.c.l.b16 %v539
        %v630 = vunpack.c.l.b16 %v540
        %v631 = vunpack.c.h.b16 %v540
        %v632 = vunpack.c.l.b16 %v541
        %v633 = vunpack.c.l.b16 %v542
        %v634 = vunpack.c.h.b16 %v542
        %v635 = vunpack.c.l.b16 %v543
        %v636 = vunpack.c.l.b16 %v544
        %v637 = vunpack.c.h.b16 %v544
        %v638 = vunpack.c.l.b16 %v545
        %v639 = vunpack.c.l.b16 %v546
        %v640 = vunpack.c.h.b16 %v546
        %v641 = vunpack.c.l.b16 %v547
        %v642 = vunpack.c.l.b16 %v548
        %v643 = vunpack.c.h.b16 %v548
        %v644 = vunpack.c.l.b16 %v549
        %v645 = vunpack.c.l.b16 %v550
        %v646 = vunpack.c.h.b16 %v550
        %v647 = vunpack.c.l.b16 %v551
        %v648 = vunpack.c.l.b16 %v552
        %v649 = vunpack.c.h.b16 %v552
        %v650 = vunpack.c.l.b16 %v553
        %v651 = vpack.c.b16 %v606, %v603
        %v652 = vpack.c.b16 %v607, %v604
        %v653 = vpack.c.b16 %v608, %v605
        %v654 = vpack.c.b16 %v612, %v609
        %v655 = vpack.c.b16 %v613, %v610
        %v656 = vpack.c.b16 %v614, %v611
        %v657 = vpack.c.b16 %v618, %v615
        %v658 = vpack.c.b16 %v619, %v616
        %v659 = vpack.c.b16 %v620, %v617
        %v660 = vpack.c.b16 %v624, %v621
        %v661 = vpack.c.b16 %v625, %v622
        %v662 = vpack.c.b16 %v626, %v623
        %v663 = vpack.c.b16 %v630, %v627
        %v664 = vpack.c.b16 %v631, %v628
        %v665 = vpack.c.b16 %v632, %v629
        %v666 = vpack.c.b16 %v636, %v633
        %v667 = vpack.c.b16 %v637, %v634
        %v668 = vpack.c.b16 %v638, %v635
        %v669 = vpack.c.b16 %v642, %v639
        %v670 = vpack.c.b16 %v643, %v640
        %v671 = vpack.c.b16 %v644, %v641
        %v672 = vpack.c.b16 %v648, %v645
        %v673 = vpack.c.b16 %v649, %v646
        %v674 = vpack.c.b16 %v650, %v647
        %699 = vmatprep.subr.bf16.mxu0 %v673
        %700 = vmatpush1.bf16.msra.mxu0 %v672
        %701 = vmatprep.subr.bf16.mxu0 %v670
        %702 = vmatpush1.bf16.msra.mxu0 %v669
        %703 = vmatprep.subr.bf16.mxu0 %v667
        %704 = vmatpush1.bf16.msra.mxu0 %v666
        %705 = vmatprep.subr.bf16.mxu0 %v664
        %706 = vmatpush1.bf16.msra.mxu0 %v663
        %707 = vmatprep.subr.bf16.mxu0 %v661
        %708 = vmatpush1.bf16.msra.mxu0 %v660
        %709 = vmatprep.subr.bf16.mxu0 %v658
        %710 = vmatpush1.bf16.msra.mxu0 %v657
        %711 = vmatprep.subr.bf16.mxu0 %v655
        %712 = vmatpush1.bf16.msra.mxu0 %v654
        %713 = vmatprep.subr.bf16.mxu0 %v652
        %714 = vmatpush1.bf16.msra.mxu0 %v651
        %715 = vmatprep.subr.bf16.mxu0 0
        %716 = vmatpush2.bf16.msra.mxu0 0
        %717 = vmatprep.subr.bf16.mxu0 0
        %718 = vmatpush2.bf16.msra.mxu0 0
        %719 = vmatprep.subr.bf16.mxu0 0
        %720 = vmatpush2.bf16.msra.mxu0 0
        %721 = vmatprep.subr.bf16.mxu0 0
        %722 = vmatpush2.bf16.msra.mxu0 0
        %723 = vmatprep.subr.bf16.mxu0 0
        %724 = vmatpush2.bf16.msra.mxu0 0
        %725 = vmatprep.subr.bf16.mxu0 0
        %726 = vmatpush2.bf16.msra.mxu0 0
        %727 = vmatprep.subr.bf16.mxu0 0
        %728 = vmatpush2.bf16.msra.mxu0 0
        %729 = vmatprep.subr.bf16.mxu0 0
        %730 = vmatpush2.bf16.msra.mxu0 0
        %731 = vmatprep.mubr.bf16.mxu0 0
        %732 = vmatmul.mubr.bf16.gmra.mxu0 %v521
        %v733 = vpop.f32.mrf.mxu0
        %v734 = vadd.f32 %v559, %v733
        %v735 = vpop.f32.mrf.mxu0
        %v736 = vadd.f32 %v563, %v735
        %v737 = vpop.f32.mrf.mxu0
        %v738 = vpop.f32.mrf.mxu0
        %739 = vdwg.mxu0
        %740 = vmatprep.subr.bf16.mxu0 0
        %741 = vmatpush1.bf16.msra.mxu0 %v674
        %742 = vmatprep.subr.bf16.mxu0 0
        %743 = vmatpush1.bf16.msra.mxu0 %v671
        %744 = vmatprep.subr.bf16.mxu0 0
        %745 = vmatpush1.bf16.msra.mxu0 %v668
        %746 = vmatprep.subr.bf16.mxu0 0
        %747 = vmatpush1.bf16.msra.mxu0 %v665
        %748 = vmatprep.subr.bf16.mxu0 0
        %749 = vmatpush1.bf16.msra.mxu0 %v662
        %750 = vmatprep.subr.bf16.mxu0 0
        %751 = vmatpush1.bf16.msra.mxu0 %v659
        %752 = vmatprep.subr.bf16.mxu0 0
        %753 = vmatpush1.bf16.msra.mxu0 %v656
        %754 = vmatprep.subr.bf16.mxu0 0
        %755 = vmatpush1.bf16.msra.mxu0 %v653
        %756 = vmatprep.subr.bf16.mxu0 0
        %757 = vmatpush2.bf16.msra.mxu0 0
        %758 = vmatprep.subr.bf16.mxu0 0
        %759 = vmatpush2.bf16.msra.mxu0 0
        %760 = vmatprep.subr.bf16.mxu0 0
        %761 = vmatpush2.bf16.msra.mxu0 0
        %762 = vmatprep.subr.bf16.mxu0 0
        %763 = vmatpush2.bf16.msra.mxu0 0
        %764 = vmatprep.subr.bf16.mxu0 0
        %765 = vmatpush2.bf16.msra.mxu0 0
        %766 = vmatprep.subr.bf16.mxu0 0
        %767 = vmatpush2.bf16.msra.mxu0 0
        %768 = vmatprep.subr.bf16.mxu0 0
        %769 = vmatpush2.bf16.msra.mxu0 0
        %770 = vmatprep.subr.bf16.mxu0 0
        %771 = vmatpush2.bf16.msra.mxu0 0
        %772 = vmatprep.mubr.bf16.mxu0 0
        %773 = vmatmul.mubr.bf16.gmra.mxu0 %v521
        %v774 = vpop.f32.mrf.mxu0
        %v775 = vadd.f32 %v567, %v774
        %v776 = vpop.f32.mrf.mxu0
        %v777 = vpop.f32.mrf.mxu0
        %v778 = vpop.f32.mrf.mxu0
        %779 = vdwg.mxu0
        %vm780 = vcmask 261120
        %v782 = vsel %vm780, %v734, 0
        %v785 = vsel %vm780, %v736, 0
        %787 = vmatprep.subr.mxu0 0.0
        %788 = vmatpush1.xpose.msra.mxu0 0.0
        %789 = vmatprep.subr.mxu0 0.0
        %790 = vmatpush1.xpose.msra.mxu0 0.0
        %791 = vmatprep.subr.mxu0 0.0
        %792 = vmatpush1.xpose.msra.mxu0 0.0
        %793 = vmatprep.subr.mxu0 0.0
        %794 = vmatpush1.xpose.msra.mxu0 0.0
        %795 = vmatprep.subr.mxu0 0.0
        %796 = vmatpush1.xpose.msra.mxu0 0.0
        %797 = vmatprep.subr.mxu0 0.0
        %798 = vmatpush1.xpose.msra.mxu0 0.0
        %799 = vmatprep.subr.mxu0 0.0
        %800 = vmatpush1.xpose.msra.mxu0 0.0
        %801 = vmatprep.subr.mxu0 0.0
        %802 = vmatpush1.xpose.msra.mxu0 0.0
        %803 = vmatprep.subr.mxu0 0.0
        %804 = vmatpush1.xpose.msra.mxu0 0.0
        %805 = vmatprep.subr.mxu0 0.0
        %806 = vmatpush1.xpose.msra.mxu0 0.0
        %807 = vmatprep.subr.mxu0 0.0
        %808 = vmatpush1.xpose.msra.mxu0 0.0
        %809 = vmatprep.subr.mxu0 0.0
        %810 = vmatpush1.xpose.msra.mxu0 0.0
        %811 = vmatprep.subr.mxu0 0.0
        %812 = vmatpush1.xpose.msra.mxu0 0.0
        %813 = vmatprep.subr.mxu0 0.0
        %814 = vmatpush1.xpose.msra.mxu0 0.0
        %815 = vmatprep.subr.mxu0 0.0
        %816 = vmatpush1.xpose.msra.mxu0 0.0
        %817 = vmatprep.subr.mxu0 0.0
        %818 = vmatpush1.xpose.msra.mxu0 %v785
        %819 = vmatprep.subr.mxu0 0.0
        %820 = vmatpush2.xpose.msra.mxu0 0.0
        %821 = vmatprep.subr.mxu0 0.0
        %822 = vmatpush2.xpose.msra.mxu0 0.0
        %823 = vmatprep.subr.mxu0 0.0
        %824 = vmatpush2.xpose.msra.mxu0 0.0
        %825 = vmatprep.subr.mxu0 0.0
        %826 = vmatpush2.xpose.msra.mxu0 0.0
        %827 = vmatprep.subr.mxu0 0.0
        %828 = vmatpush2.xpose.msra.mxu0 0.0
        %829 = vmatprep.subr.mxu0 0.0
        %830 = vmatpush2.xpose.msra.mxu0 0.0
        %831 = vmatprep.subr.mxu0 0.0
        %832 = vmatpush2.xpose.msra.mxu0 0.0
        %833 = vmatprep.subr.mxu0 0.0
        %834 = vmatpush2.xpose.msra.mxu0 0.0
        %835 = vmatprep.subr.mxu0 0.0
        %836 = vmatpush2.xpose.msra.mxu0 0.0
        %837 = vmatprep.subr.mxu0 0.0
        %838 = vmatpush2.xpose.msra.mxu0 0.0
        %839 = vmatprep.subr.mxu0 0.0
        %840 = vmatpush2.xpose.msra.mxu0 0.0
        %841 = vmatprep.subr.mxu0 0.0
        %842 = vmatpush2.xpose.msra.mxu0 0.0
        %843 = vmatprep.subr.mxu0 0.0
        %844 = vmatpush2.xpose.msra.mxu0 0.0
        %845 = vmatprep.subr.mxu0 0.0
        %846 = vmatpush2.xpose.msra.mxu0 0.0
        %847 = vmatprep.subr.mxu0 0.0
        %848 = vmatpush2.xpose.msra.mxu0 0.0
        %849 = vmatprep.subr.mxu0 0.0
        %850 = vmatpush2.xpose.msra.mxu0 0.0
        %851 = vmatprep.mubr.f32.mxu0 0.0
        %852 = vmatmul.mubr.f32.gmra.mxu0 %v782
        %v853 = vpop.f32.mrf.mxu0
        %v854 = vadd.f32 0.0, %v853
        %v855 = vpop.f32.mrf.mxu0
        %856 = vdwg.mxu0
        %v857 = vmul.f32 %v854, 0.2
        %vm858 = vcmask 64512
        %v859 = vsel %vm858, %v857, -inf
        %860 = vmax.xlane.f32.xlu0 %v859
        %v861 = vpop.xlane.xlu0 %860
        %v862 = vsub.f32 %v857, %v861
        %v863 = vmul.f32 %v862, 1.442695
        %v864 = vpow.pop %v863
        %v865 = vsel %vm858, %v864, 0.0
        %866 = vadd.xlane.f32.xlu0 %v865
        %v867 = vpop.xlane.xlu0 %866
        %v868 = vrcp.pop %v867
        %v869 = vmul.f32 %v864, %v868
        %v871 = vsel %vm858, %v869, 0
        %873 = vmatprep.subr.mxu0 0.0
        %874 = vmatpush1.msra.mxu0 0.0
        %875 = vmatprep.subr.mxu0 0.0
        %876 = vmatpush1.msra.mxu0 0.0
        %877 = vmatprep.subr.mxu0 0.0
        %878 = vmatpush1.msra.mxu0 0.0
        %879 = vmatprep.subr.mxu0 0.0
        %880 = vmatpush1.msra.mxu0 0.0
        %881 = vmatprep.subr.mxu0 0.0
        %882 = vmatpush1.msra.mxu0 0.0
        %883 = vmatprep.subr.mxu0 0.0
        %884 = vmatpush1.msra.mxu0 0.0
        %885 = vmatprep.subr.mxu0 0.0
        %886 = vmatpush1.msra.mxu0 0.0
        %887 = vmatprep.subr.mxu0 0.0
        %888 = vmatpush1.msra.mxu0 0.0
        %889 = vmatprep.subr.mxu0 0.0
        %890 = vmatpush1.msra.mxu0 0.0
        %891 = vmatprep.subr.mxu0 0.0
        %892 = vmatpush1.msra.mxu0 0.0
        %893 = vmatprep.subr.mxu0 0.0
        %894 = vmatpush1.msra.mxu0 0.0
        %895 = vmatprep.subr.mxu0 0.0
        %896 = vmatpush1.msra.mxu0 0.0
        %897 = vmatprep.subr.mxu0 0.0
        %898 = vmatpush1.msra.mxu0 0.0
        %899 = vmatprep.subr.mxu0 0.0
        %900 = vmatpush1.msra.mxu0 0.0
        %901 = vmatprep.subr.mxu0 0.0
        %902 = vmatpush1.msra.mxu0 0.0
        %903 = vmatprep.subr.mxu0 0.0
        %904 = vmatpush1.msra.mxu0 %v775
        %905 = vmatprep.subr.mxu0 0.0
        %906 = vmatpush2.msra.mxu0 0.0
        %907 = vmatprep.subr.mxu0 0.0
        %908 = vmatpush2.msra.mxu0 0.0
        %909 = vmatprep.subr.mxu0 0.0
        %910 = vmatpush2.msra.mxu0 0.0
        %911 = vmatprep.subr.mxu0 0.0
        %912 = vmatpush2.msra.mxu0 0.0
        %913 = vmatprep.subr.mxu0 0.0
        %914 = vmatpush2.msra.mxu0 0.0
        %915 = vmatprep.subr.mxu0 0.0
        %916 = vmatpush2.msra.mxu0 0.0
        %917 = vmatprep.subr.mxu0 0.0
        %918 = vmatpush2.msra.mxu0 0.0
        %919 = vmatprep.subr.mxu0 0.0
        %920 = vmatpush2.msra.mxu0 0.0
        %921 = vmatprep.subr.mxu0 0.0
        %922 = vmatpush2.msra.mxu0 0.0
        %923 = vmatprep.subr.mxu0 0.0
        %924 = vmatpush2.msra.mxu0 0.0
        %925 = vmatprep.subr.mxu0 0.0
        %926 = vmatpush2.msra.mxu0 0.0
        %927 = vmatprep.subr.mxu0 0.0
        %928 = vmatpush2.msra.mxu0 0.0
        %929 = vmatprep.subr.mxu0 0.0
        %930 = vmatpush2.msra.mxu0 0.0
        %931 = vmatprep.subr.mxu0 0.0
        %932 = vmatpush2.msra.mxu0 0.0
        %933 = vmatprep.subr.mxu0 0.0
        %934 = vmatpush2.msra.mxu0 0.0
        %935 = vmatprep.subr.mxu0 0.0
        %936 = vmatpush2.msra.mxu0 0.0
        %937 = vmatprep.mubr.f32.mxu0 0.0
        %938 = vmatmul.mubr.f32.gmra.mxu0 %v871
        %v939 = vpop.f32.mrf.mxu0
        %v940 = vadd.f32 0.0, %v939
        %v941 = vpop.f32.mrf.mxu0
        %942 = vdwg.mxu0
        %v943 = vpack.c.bf16 %v940, %v940
        %v944 = vld [vmem:[#allocation7] sm:$0xf]
        %v945 = vld [vmem:[#allocation7 + $0x4] sm:$0xf]
        %v946 = vld [vmem:[#allocation7 + $0x8] sm:$0xf]
        %v947 = vld [vmem:[#allocation7 + $0xc] sm:$0xf]
        %948 = vrot.lane.b32.xlu0 %v734, 96
        %v949 = vpop.permute.xlu0 %948
        %950 = vrot.lane.b32.xlu0 %v736, 96
        %v951 = vpop.permute.xlu0 %950
        %v952 = vsel %vm780, %v949, 0
        %v954 = vsel %vm780, %v951, 0
        %956 = vmatprep.subr.mxu0 0.0
        %957 = vmatpush1.xpose.msra.mxu0 0.0
        %958 = vmatprep.subr.mxu0 0.0
        %959 = vmatpush1.xpose.msra.mxu0 0.0
        %960 = vmatprep.subr.mxu0 0.0
        %961 = vmatpush1.xpose.msra.mxu0 0.0
        %962 = vmatprep.subr.mxu0 0.0
        %963 = vmatpush1.xpose.msra.mxu0 0.0
        %964 = vmatprep.subr.mxu0 0.0
        %965 = vmatpush1.xpose.msra.mxu0 0.0
        %966 = vmatprep.subr.mxu0 0.0
        %967 = vmatpush1.xpose.msra.mxu0 0.0
        %968 = vmatprep.subr.mxu0 0.0
        %969 = vmatpush1.xpose.msra.mxu0 0.0
        %970 = vmatprep.subr.mxu0 0.0
        %971 = vmatpush1.xpose.msra.mxu0 0.0
        %972 = vmatprep.subr.mxu0 0.0
        %973 = vmatpush1.xpose.msra.mxu0 0.0
        %974 = vmatprep.subr.mxu0 0.0
        %975 = vmatpush1.xpose.msra.mxu0 0.0
        %976 = vmatprep.subr.mxu0 0.0
        %977 = vmatpush1.xpose.msra.mxu0 0.0
        %978 = vmatprep.subr.mxu0 0.0
        %979 = vmatpush1.xpose.msra.mxu0 0.0
        %980 = vmatprep.subr.mxu0 0.0
        %981 = vmatpush1.xpose.msra.mxu0 0.0
        %982 = vmatprep.subr.mxu0 0.0
        %983 = vmatpush1.xpose.msra.mxu0 0.0
        %984 = vmatprep.subr.mxu0 0.0
        %985 = vmatpush1.xpose.msra.mxu0 0.0
        %986 = vmatprep.subr.mxu0 0.0
        %987 = vmatpush1.xpose.msra.mxu0 %v954
        %988 = vmatprep.subr.mxu0 0.0
        %989 = vmatpush2.xpose.msra.mxu0 0.0
        %990 = vmatprep.subr.mxu0 0.0
        %991 = vmatpush2.xpose.msra.mxu0 0.0
        %992 = vmatprep.subr.mxu0 0.0
        %993 = vmatpush2.xpose.msra.mxu0 0.0
        %994 = vmatprep.subr.mxu0 0.0
        %995 = vmatpush2.xpose.msra.mxu0 0.0
        %996 = vmatprep.subr.mxu0 0.0
        %997 = vmatpush2.xpose.msra.mxu0 0.0
        %998 = vmatprep.subr.mxu0 0.0
        %999 = vmatpush2.xpose.msra.mxu0 0.0
        %1000 = vmatprep.subr.mxu0 0.0
        %1001 = vmatpush2.xpose.msra.mxu0 0.0
        %1002 = vmatprep.subr.mxu0 0.0
        %1003 = vmatpush2.xpose.msra.mxu0 0.0
        %1004 = vmatprep.subr.mxu0 0.0
        %1005 = vmatpush2.xpose.msra.mxu0 0.0
        %1006 = vmatprep.subr.mxu0 0.0
        %1007 = vmatpush2.xpose.msra.mxu0 0.0
        %1008 = vmatprep.subr.mxu0 0.0
        %1009 = vmatpush2.xpose.msra.mxu0 0.0
        %1010 = vmatprep.subr.mxu0 0.0
        %1011 = vmatpush2.xpose.msra.mxu0 0.0
        %1012 = vmatprep.subr.mxu0 0.0
        %1013 = vmatpush2.xpose.msra.mxu0 0.0
        %1014 = vmatprep.subr.mxu0 0.0
        %1015 = vmatpush2.xpose.msra.mxu0 0.0
        %1016 = vmatprep.subr.mxu0 0.0
        %1017 = vmatpush2.xpose.msra.mxu0 0.0
        %1018 = vmatprep.subr.mxu0 0.0
        %1019 = vmatpush2.xpose.msra.mxu0 0.0
        %1020 = vmatprep.mubr.f32.mxu0 0.0
        %1021 = vmatmul.mubr.f32.gmra.mxu0 %v952
        %v1022 = vpop.f32.mrf.mxu0
        %v1023 = vadd.f32 0.0, %v1022
        %v1024 = vpop.f32.mrf.mxu0
        %1025 = vdwg.mxu0
        %v1026 = vmul.f32 %v1023, 0.2
        %v1027 = vsel %vm858, %v1026, -inf
        %1028 = vmax.xlane.f32.xlu0 %v1027
        %v1029 = vpop.xlane.xlu0 %1028
        %v1030 = vsub.f32 %v1026, %v1029
        %v1031 = vmul.f32 %v1030, 1.442695
        %v1032 = vpow.pop %v1031
        %v1033 = vsel %vm858, %v1032, 0.0
        %1034 = vadd.xlane.f32.xlu0 %v1033
        %v1035 = vpop.xlane.xlu0 %1034
        %v1036 = vrcp.pop %v1035
        %v1037 = vmul.f32 %v1032, %v1036
        %1039 = vrot.lane.b32.xlu0 %v775, 96
        %v1040 = vpop.permute.xlu0 %1039
        %v1043 = vsel %vm858, %v1037, 0
        %1045 = vmatprep.subr.mxu0 0.0
        %1046 = vmatpush1.msra.mxu0 0.0
        %1047 = vmatprep.subr.mxu0 0.0
        %1048 = vmatpush1.msra.mxu0 0.0
        %1049 = vmatprep.subr.mxu0 0.0
        %1050 = vmatpush1.msra.mxu0 0.0
        %1051 = vmatprep.subr.mxu0 0.0
        %1052 = vmatpush1.msra.mxu0 0.0
        %1053 = vmatprep.subr.mxu0 0.0
        %1054 = vmatpush1.msra.mxu0 0.0
        %1055 = vmatprep.subr.mxu0 0.0
        %1056 = vmatpush1.msra.mxu0 0.0
        %1057 = vmatprep.subr.mxu0 0.0
        %1058 = vmatpush1.msra.mxu0 0.0
        %1059 = vmatprep.subr.mxu0 0.0
        %1060 = vmatpush1.msra.mxu0 0.0
        %1061 = vmatprep.subr.mxu0 0.0
        %1062 = vmatpush1.msra.mxu0 0.0
        %1063 = vmatprep.subr.mxu0 0.0
        %1064 = vmatpush1.msra.mxu0 0.0
        %1065 = vmatprep.subr.mxu0 0.0
        %1066 = vmatpush1.msra.mxu0 0.0
        %1067 = vmatprep.subr.mxu0 0.0
        %1068 = vmatpush1.msra.mxu0 0.0
        %1069 = vmatprep.subr.mxu0 0.0
        %1070 = vmatpush1.msra.mxu0 0.0
        %1071 = vmatprep.subr.mxu0 0.0
        %1072 = vmatpush1.msra.mxu0 0.0
        %1073 = vmatprep.subr.mxu0 0.0
        %1074 = vmatpush1.msra.mxu0 0.0
        %1075 = vmatprep.subr.mxu0 0.0
        %1076 = vmatpush1.msra.mxu0 %v1040
        %1077 = vmatprep.subr.mxu0 0.0
        %1078 = vmatpush2.msra.mxu0 0.0
        %1079 = vmatprep.subr.mxu0 0.0
        %1080 = vmatpush2.msra.mxu0 0.0
        %1081 = vmatprep.subr.mxu0 0.0
        %1082 = vmatpush2.msra.mxu0 0.0
        %1083 = vmatprep.subr.mxu0 0.0
        %1084 = vmatpush2.msra.mxu0 0.0
        %1085 = vmatprep.subr.mxu0 0.0
        %1086 = vmatpush2.msra.mxu0 0.0
        %1087 = vmatprep.subr.mxu0 0.0
        %1088 = vmatpush2.msra.mxu0 0.0
        %1089 = vmatprep.subr.mxu0 0.0
        %1090 = vmatpush2.msra.mxu0 0.0
        %1091 = vmatprep.subr.mxu0 0.0
        %1092 = vmatpush2.msra.mxu0 0.0
        %1093 = vmatprep.subr.mxu0 0.0
        %1094 = vmatpush2.msra.mxu0 0.0
        %1095 = vmatprep.subr.mxu0 0.0
        %1096 = vmatpush2.msra.mxu0 0.0
        %1097 = vmatprep.subr.mxu0 0.0
        %1098 = vmatpush2.msra.mxu0 0.0
        %1099 = vmatprep.subr.mxu0 0.0
        %1100 = vmatpush2.msra.mxu0 0.0
        %1101 = vmatprep.subr.mxu0 0.0
        %1102 = vmatpush2.msra.mxu0 0.0
        %1103 = vmatprep.subr.mxu0 0.0
        %1104 = vmatpush2.msra.mxu0 0.0
        %1105 = vmatprep.subr.mxu0 0.0
        %1106 = vmatpush2.msra.mxu0 0.0
        %1107 = vmatprep.subr.mxu0 0.0
        %1108 = vmatpush2.msra.mxu0 0.0
        %1109 = vmatprep.mubr.f32.mxu0 0.0
        %1110 = vmatmul.mubr.f32.gmra.mxu0 %v1043
        %v1111 = vpop.f32.mrf.mxu0
        %v1112 = vadd.f32 0.0, %v1111
        %v1113 = vpop.f32.mrf.mxu0
        %1114 = vdwg.mxu0
        %v1115 = vpack.c.bf16 %v1112, %v1112
        %v1116 = vld [vmem:[#allocation7 + $0x10] sm:$0xf]
        %v1117 = vld [vmem:[#allocation7 + $0x14] sm:$0xf]
        %v1118 = vld [vmem:[#allocation7 + $0x18] sm:$0xf]
        %v1119 = vld [vmem:[#allocation7 + $0x1c] sm:$0xf]
        %v1124 = vunpack.c.l.b16 %v1116
        %v1125 = vunpack.c.l.b16 %v1117
        %v1126 = vunpack.c.l.b16 %v1118
        %v1127 = vunpack.c.l.b16 %v1119
        %v1128 = vpack.c.b16 %v1125, %v1124
        %v1129 = vpack.c.b16 %v1127, %v1126
        %v1133 = vsel %vm780, %v1115, 0
        %1135 = vmatprep.subr.bf16.mxu0 0
        %1136 = vmatpush1.bf16.msra.mxu0 0
        %1137 = vmatprep.subr.bf16.mxu0 0
        %1138 = vmatpush1.bf16.msra.mxu0 0
        %1139 = vmatprep.subr.bf16.mxu0 0
        %1140 = vmatpush1.bf16.msra.mxu0 0
        %1141 = vmatprep.subr.bf16.mxu0 0
        %1142 = vmatpush1.bf16.msra.mxu0 0
        %1143 = vmatprep.subr.bf16.mxu0 0
        %1144 = vmatpush1.bf16.msra.mxu0 0
        %1145 = vmatprep.subr.bf16.mxu0 0
        %1146 = vmatpush1.bf16.msra.mxu0 0
        %1147 = vmatprep.subr.bf16.mxu0 0
        %1148 = vmatpush1.bf16.msra.mxu0 %v1129
        %1149 = vmatprep.subr.bf16.mxu0 0
        %1150 = vmatpush1.bf16.msra.mxu0 %v1128
        %1151 = vmatprep.subr.bf16.mxu0 0
        %1152 = vmatpush2.bf16.msra.mxu0 0
        %1153 = vmatprep.subr.bf16.mxu0 0
        %1154 = vmatpush2.bf16.msra.mxu0 0
        %1155 = vmatprep.subr.bf16.mxu0 0
        %1156 = vmatpush2.bf16.msra.mxu0 0
        %1157 = vmatprep.subr.bf16.mxu0 0
        %1158 = vmatpush2.bf16.msra.mxu0 0
        %1159 = vmatprep.subr.bf16.mxu0 0
        %1160 = vmatpush2.bf16.msra.mxu0 0
        %1161 = vmatprep.subr.bf16.mxu0 0
        %1162 = vmatpush2.bf16.msra.mxu0 0
        %1163 = vmatprep.subr.bf16.mxu0 0
        %1164 = vmatpush2.bf16.msra.mxu0 0
        %1165 = vmatprep.subr.bf16.mxu0 0
        %1166 = vmatpush2.bf16.msra.mxu0 0
        %1167 = vmatprep.mubr.bf16.mxu0 0
        %1168 = vmatmul.mubr.bf16.gmra.mxu0 %v1133
        %v1169 = vpop.f32.mrf.mxu0
        %v1170 = vadd.f32 0.0, %v1169
        %v1171 = vpop.f32.mrf.mxu0
        %v1172 = vpop.f32.mrf.mxu0
        %v1173 = vpop.f32.mrf.mxu0
        %1174 = vdwg.mxu0
        %v1179 = vunpack.c.l.b16 %v944
        %v1180 = vunpack.c.l.b16 %v945
        %v1181 = vunpack.c.l.b16 %v946
        %v1182 = vunpack.c.l.b16 %v947
        %v1183 = vpack.c.b16 %v1180, %v1179
        %v1184 = vpack.c.b16 %v1182, %v1181
        %v1188 = vsel %vm780, %v943, 0
        %1190 = vmatprep.subr.bf16.mxu0 0
        %1191 = vmatpush1.bf16.msra.mxu0 0
        %1192 = vmatprep.subr.bf16.mxu0 0
        %1193 = vmatpush1.bf16.msra.mxu0 0
        %1194 = vmatprep.subr.bf16.mxu0 0
        %1195 = vmatpush1.bf16.msra.mxu0 0
        %1196 = vmatprep.subr.bf16.mxu0 0
        %1197 = vmatpush1.bf16.msra.mxu0 0
        %1198 = vmatprep.subr.bf16.mxu0 0
        %1199 = vmatpush1.bf16.msra.mxu0 0
        %1200 = vmatprep.subr.bf16.mxu0 0
        %1201 = vmatpush1.bf16.msra.mxu0 0
        %1202 = vmatprep.subr.bf16.mxu0 0
        %1203 = vmatpush1.bf16.msra.mxu0 %v1184
        %1204 = vmatprep.subr.bf16.mxu0 0
        %1205 = vmatpush1.bf16.msra.mxu0 %v1183
        %1206 = vmatprep.subr.bf16.mxu0 0
        %1207 = vmatpush2.bf16.msra.mxu0 0
        %1208 = vmatprep.subr.bf16.mxu0 0
        %1209 = vmatpush2.bf16.msra.mxu0 0
        %1210 = vmatprep.subr.bf16.mxu0 0
        %1211 = vmatpush2.bf16.msra.mxu0 0
        %1212 = vmatprep.subr.bf16.mxu0 0
        %1213 = vmatpush2.bf16.msra.mxu0 0
        %1214 = vmatprep.subr.bf16.mxu0 0
        %1215 = vmatpush2.bf16.msra.mxu0 0
        %1216 = vmatprep.subr.bf16.mxu0 0
        %1217 = vmatpush2.bf16.msra.mxu0 0
        %1218 = vmatprep.subr.bf16.mxu0 0
        %1219 = vmatpush2.bf16.msra.mxu0 0
        %1220 = vmatprep.subr.bf16.mxu0 0
        %1221 = vmatpush2.bf16.msra.mxu0 0
        %1222 = vmatprep.mubr.bf16.mxu0 0
        %1223 = vmatmul.mubr.bf16.gmra.mxu0 %v1188
        %v1224 = vpop.f32.mrf.mxu0
        %v1225 = vadd.f32 %v1170, %v1224
        %v1226 = vpop.f32.mrf.mxu0
        %v1227 = vpop.f32.mrf.mxu0
        %v1228 = vpop.f32.mrf.mxu0
        %1229 = vdwg.mxu0
        %1230 = vrot.lane.b32.xlu0 %v734, 64
        %v1231 = vpop.permute.xlu0 %1230
        %1232 = vrot.lane.b32.xlu0 %v736, 64
        %v1233 = vpop.permute.xlu0 %1232
        %v1234 = vsel %vm780, %v1231, 0
        %v1236 = vsel %vm780, %v1233, 0
        %1238 = vmatprep.subr.mxu0 0.0
        %1239 = vmatpush1.xpose.msra.mxu0 0.0
        %1240 = vmatprep.subr.mxu0 0.0
        %1241 = vmatpush1.xpose.msra.mxu0 0.0
        %1242 = vmatprep.subr.mxu0 0.0
        %1243 = vmatpush1.xpose.msra.mxu0 0.0
        %1244 = vmatprep.subr.mxu0 0.0
        %1245 = vmatpush1.xpose.msra.mxu0 0.0
        %1246 = vmatprep.subr.mxu0 0.0
        %1247 = vmatpush1.xpose.msra.mxu0 0.0
        %1248 = vmatprep.subr.mxu0 0.0
        %1249 = vmatpush1.xpose.msra.mxu0 0.0
        %1250 = vmatprep.subr.mxu0 0.0
        %1251 = vmatpush1.xpose.msra.mxu0 0.0
        %1252 = vmatprep.subr.mxu0 0.0
        %1253 = vmatpush1.xpose.msra.mxu0 0.0
        %1254 = vmatprep.subr.mxu0 0.0
        %1255 = vmatpush1.xpose.msra.mxu0 0.0
        %1256 = vmatprep.subr.mxu0 0.0
        %1257 = vmatpush1.xpose.msra.mxu0 0.0
        %1258 = vmatprep.subr.mxu0 0.0
        %1259 = vmatpush1.xpose.msra.mxu0 0.0
        %1260 = vmatprep.subr.mxu0 0.0
        %1261 = vmatpush1.xpose.msra.mxu0 0.0
        %1262 = vmatprep.subr.mxu0 0.0
        %1263 = vmatpush1.xpose.msra.mxu0 0.0
        %1264 = vmatprep.subr.mxu0 0.0
        %1265 = vmatpush1.xpose.msra.mxu0 0.0
        %1266 = vmatprep.subr.mxu0 0.0
        %1267 = vmatpush1.xpose.msra.mxu0 0.0
        %1268 = vmatprep.subr.mxu0 0.0
        %1269 = vmatpush1.xpose.msra.mxu0 %v1236
        %1270 = vmatprep.subr.mxu0 0.0
        %1271 = vmatpush2.xpose.msra.mxu0 0.0
        %1272 = vmatprep.subr.mxu0 0.0
        %1273 = vmatpush2.xpose.msra.mxu0 0.0
        %1274 = vmatprep.subr.mxu0 0.0
        %1275 = vmatpush2.xpose.msra.mxu0 0.0
        %1276 = vmatprep.subr.mxu0 0.0
        %1277 = vmatpush2.xpose.msra.mxu0 0.0
        %1278 = vmatprep.subr.mxu0 0.0
        %1279 = vmatpush2.xpose.msra.mxu0 0.0
        %1280 = vmatprep.subr.mxu0 0.0
        %1281 = vmatpush2.xpose.msra.mxu0 0.0
        %1282 = vmatprep.subr.mxu0 0.0
        %1283 = vmatpush2.xpose.msra.mxu0 0.0
        %1284 = vmatprep.subr.mxu0 0.0
        %1285 = vmatpush2.xpose.msra.mxu0 0.0
        %1286 = vmatprep.subr.mxu0 0.0
        %1287 = vmatpush2.xpose.msra.mxu0 0.0
        %1288 = vmatprep.subr.mxu0 0.0
        %1289 = vmatpush2.xpose.msra.mxu0 0.0
        %1290 = vmatprep.subr.mxu0 0.0
        %1291 = vmatpush2.xpose.msra.mxu0 0.0
        %1292 = vmatprep.subr.mxu0 0.0
        %1293 = vmatpush2.xpose.msra.mxu0 0.0
        %1294 = vmatprep.subr.mxu0 0.0
        %1295 = vmatpush2.xpose.msra.mxu0 0.0
        %1296 = vmatprep.subr.mxu0 0.0
        %1297 = vmatpush2.xpose.msra.mxu0 0.0
        %1298 = vmatprep.subr.mxu0 0.0
        %1299 = vmatpush2.xpose.msra.mxu0 0.0
        %1300 = vmatprep.subr.mxu0 0.0
        %1301 = vmatpush2.xpose.msra.mxu0 0.0
        %1302 = vmatprep.mubr.f32.mxu0 0.0
        %1303 = vmatmul.mubr.f32.gmra.mxu0 %v1234
        %v1304 = vpop.f32.mrf.mxu0
        %v1305 = vadd.f32 0.0, %v1304
        %v1306 = vpop.f32.mrf.mxu0
        %1307 = vdwg.mxu0
        %v1308 = vmul.f32 %v1305, 0.2
        %v1309 = vsel %vm858, %v1308, -inf
        %1310 = vmax.xlane.f32.xlu0 %v1309
        %v1311 = vpop.xlane.xlu0 %1310
        %v1312 = vsub.f32 %v1308, %v1311
        %v1313 = vmul.f32 %v1312, 1.442695
        %v1314 = vpow.pop %v1313
        %v1315 = vsel %vm858, %v1314, 0.0
        %1316 = vadd.xlane.f32.xlu0 %v1315
        %v1317 = vpop.xlane.xlu0 %1316
        %v1318 = vrcp.pop %v1317
        %v1319 = vmul.f32 %v1314, %v1318
        %1320 = vrot.lane.b32.xlu0 %v775, 64
        %v1321 = vpop.permute.xlu0 %1320
        %v1324 = vsel %vm858, %v1319, 0
        %1326 = vmatprep.subr.mxu0 0.0
        %1327 = vmatpush1.msra.mxu0 0.0
        %1328 = vmatprep.subr.mxu0 0.0
        %1329 = vmatpush1.msra.mxu0 0.0
        %1330 = vmatprep.subr.mxu0 0.0
        %1331 = vmatpush1.msra.mxu0 0.0
        %1332 = vmatprep.subr.mxu0 0.0
        %1333 = vmatpush1.msra.mxu0 0.0
        %1334 = vmatprep.subr.mxu0 0.0
        %1335 = vmatpush1.msra.mxu0 0.0
        %1336 = vmatprep.subr.mxu0 0.0
        %1337 = vmatpush1.msra.mxu0 0.0
        %1338 = vmatprep.subr.mxu0 0.0
        %1339 = vmatpush1.msra.mxu0 0.0
        %1340 = vmatprep.subr.mxu0 0.0
        %1341 = vmatpush1.msra.mxu0 0.0
        %1342 = vmatprep.subr.mxu0 0.0
        %1343 = vmatpush1.msra.mxu0 0.0
        %1344 = vmatprep.subr.mxu0 0.0
        %1345 = vmatpush1.msra.mxu0 0.0
        %1346 = vmatprep.subr.mxu0 0.0
        %1347 = vmatpush1.msra.mxu0 0.0
        %1348 = vmatprep.subr.mxu0 0.0
        %1349 = vmatpush1.msra.mxu0 0.0
        %1350 = vmatprep.subr.mxu0 0.0
        %1351 = vmatpush1.msra.mxu0 0.0
        %1352 = vmatprep.subr.mxu0 0.0
        %1353 = vmatpush1.msra.mxu0 0.0
        %1354 = vmatprep.subr.mxu0 0.0
        %1355 = vmatpush1.msra.mxu0 0.0
        %1356 = vmatprep.subr.mxu0 0.0
        %1357 = vmatpush1.msra.mxu0 %v1321
        %1358 = vmatprep.subr.mxu0 0.0
        %1359 = vmatpush2.msra.mxu0 0.0
        %1360 = vmatprep.subr.mxu0 0.0
        %1361 = vmatpush2.msra.mxu0 0.0
        %1362 = vmatprep.subr.mxu0 0.0
        %1363 = vmatpush2.msra.mxu0 0.0
        %1364 = vmatprep.subr.mxu0 0.0
        %1365 = vmatpush2.msra.mxu0 0.0
        %1366 = vmatprep.subr.mxu0 0.0
        %1367 = vmatpush2.msra.mxu0 0.0
        %1368 = vmatprep.subr.mxu0 0.0
        %1369 = vmatpush2.msra.mxu0 0.0
        %1370 = vmatprep.subr.mxu0 0.0
        %1371 = vmatpush2.msra.mxu0 0.0
        %1372 = vmatprep.subr.mxu0 0.0
        %1373 = vmatpush2.msra.mxu0 0.0
        %1374 = vmatprep.subr.mxu0 0.0
        %1375 = vmatpush2.msra.mxu0 0.0
        %1376 = vmatprep.subr.mxu0 0.0
        %1377 = vmatpush2.msra.mxu0 0.0
        %1378 = vmatprep.subr.mxu0 0.0
        %1379 = vmatpush2.msra.mxu0 0.0
        %1380 = vmatprep.subr.mxu0 0.0
        %1381 = vmatpush2.msra.mxu0 0.0
        %1382 = vmatprep.subr.mxu0 0.0
        %1383 = vmatpush2.msra.mxu0 0.0
        %1384 = vmatprep.subr.mxu0 0.0
        %1385 = vmatpush2.msra.mxu0 0.0
        %1386 = vmatprep.subr.mxu0 0.0
        %1387 = vmatpush2.msra.mxu0 0.0
        %1388 = vmatprep.subr.mxu0 0.0
        %1389 = vmatpush2.msra.mxu0 0.0
        %1390 = vmatprep.mubr.f32.mxu0 0.0
        %1391 = vmatmul.mubr.f32.gmra.mxu0 %v1324
        %v1392 = vpop.f32.mrf.mxu0
        %v1393 = vadd.f32 0.0, %v1392
        %v1394 = vpop.f32.mrf.mxu0
        %1395 = vdwg.mxu0
        %v1396 = vpack.c.bf16 %v1393, %v1393
        %v1397 = vld [vmem:[#allocation7 + $0x20] sm:$0xf]
        %v1398 = vld [vmem:[#allocation7 + $0x24] sm:$0xf]
        %v1399 = vld [vmem:[#allocation7 + $0x28] sm:$0xf]
        %v1400 = vld [vmem:[#allocation7 + $0x2c] sm:$0xf]
        %v1405 = vunpack.c.l.b16 %v1397
        %v1406 = vunpack.c.l.b16 %v1398
        %v1407 = vunpack.c.l.b16 %v1399
        %v1408 = vunpack.c.l.b16 %v1400
        %v1409 = vpack.c.b16 %v1406, %v1405
        %v1410 = vpack.c.b16 %v1408, %v1407
        %v1414 = vsel %vm780, %v1396, 0
        %1416 = vmatprep.subr.bf16.mxu0 0
        %1417 = vmatpush1.bf16.msra.mxu0 0
        %1418 = vmatprep.subr.bf16.mxu0 0
        %1419 = vmatpush1.bf16.msra.mxu0 0
        %1420 = vmatprep.subr.bf16.mxu0 0
        %1421 = vmatpush1.bf16.msra.mxu0 0
        %1422 = vmatprep.subr.bf16.mxu0 0
        %1423 = vmatpush1.bf16.msra.mxu0 0
        %1424 = vmatprep.subr.bf16.mxu0 0
        %1425 = vmatpush1.bf16.msra.mxu0 0
        %1426 = vmatprep.subr.bf16.mxu0 0
        %1427 = vmatpush1.bf16.msra.mxu0 0
        %1428 = vmatprep.subr.bf16.mxu0 0
        %1429 = vmatpush1.bf16.msra.mxu0 %v1410
        %1430 = vmatprep.subr.bf16.mxu0 0
        %1431 = vmatpush1.bf16.msra.mxu0 %v1409
        %1432 = vmatprep.subr.bf16.mxu0 0
        %1433 = vmatpush2.bf16.msra.mxu0 0
        %1434 = vmatprep.subr.bf16.mxu0 0
        %1435 = vmatpush2.bf16.msra.mxu0 0
        %1436 = vmatprep.subr.bf16.mxu0 0
        %1437 = vmatpush2.bf16.msra.mxu0 0
        %1438 = vmatprep.subr.bf16.mxu0 0
        %1439 = vmatpush2.bf16.msra.mxu0 0
        %1440 = vmatprep.subr.bf16.mxu0 0
        %1441 = vmatpush2.bf16.msra.mxu0 0
        %1442 = vmatprep.subr.bf16.mxu0 0
        %1443 = vmatpush2.bf16.msra.mxu0 0
        %1444 = vmatprep.subr.bf16.mxu0 0
        %1445 = vmatpush2.bf16.msra.mxu0 0
        %1446 = vmatprep.subr.bf16.mxu0 0
        %1447 = vmatpush2.bf16.msra.mxu0 0
        %1448 = vmatprep.mubr.bf16.mxu0 0
        %1449 = vmatmul.mubr.bf16.gmra.mxu0 %v1414
        %v1450 = vpop.f32.mrf.mxu0
        %v1451 = vadd.f32 0.0, %v1450
        %v1452 = vpop.f32.mrf.mxu0
        %v1453 = vpop.f32.mrf.mxu0
        %v1454 = vpop.f32.mrf.mxu0
        %1455 = vdwg.mxu0
        %v1456 = vadd.f32 %v1225, %v1451
        %1457 = vrot.lane.b32.xlu0 %v734, 32
        %v1458 = vpop.permute.xlu0 %1457
        %1459 = vrot.lane.b32.xlu0 %v736, 32
        %v1460 = vpop.permute.xlu0 %1459
        %v1461 = vsel %vm780, %v1458, 0
        %v1463 = vsel %vm780, %v1460, 0
        %1465 = vmatprep.subr.mxu0 0.0
        %1466 = vmatpush1.xpose.msra.mxu0 0.0
        %1467 = vmatprep.subr.mxu0 0.0
        %1468 = vmatpush1.xpose.msra.mxu0 0.0
        %1469 = vmatprep.subr.mxu0 0.0
        %1470 = vmatpush1.xpose.msra.mxu0 0.0
        %1471 = vmatprep.subr.mxu0 0.0
        %1472 = vmatpush1.xpose.msra.mxu0 0.0
        %1473 = vmatprep.subr.mxu0 0.0
        %1474 = vmatpush1.xpose.msra.mxu0 0.0
        %1475 = vmatprep.subr.mxu0 0.0
        %1476 = vmatpush1.xpose.msra.mxu0 0.0
        %1477 = vmatprep.subr.mxu0 0.0
        %1478 = vmatpush1.xpose.msra.mxu0 0.0
        %1479 = vmatprep.subr.mxu0 0.0
        %1480 = vmatpush1.xpose.msra.mxu0 0.0
        %1481 = vmatprep.subr.mxu0 0.0
        %1482 = vmatpush1.xpose.msra.mxu0 0.0
        %1483 = vmatprep.subr.mxu0 0.0
        %1484 = vmatpush1.xpose.msra.mxu0 0.0
        %1485 = vmatprep.subr.mxu0 0.0
        %1486 = vmatpush1.xpose.msra.mxu0 0.0
        %1487 = vmatprep.subr.mxu0 0.0
        %1488 = vmatpush1.xpose.msra.mxu0 0.0
        %1489 = vmatprep.subr.mxu0 0.0
        %1490 = vmatpush1.xpose.msra.mxu0 0.0
        %1491 = vmatprep.subr.mxu0 0.0
        %1492 = vmatpush1.xpose.msra.mxu0 0.0
        %1493 = vmatprep.subr.mxu0 0.0
        %1494 = vmatpush1.xpose.msra.mxu0 0.0
        %1495 = vmatprep.subr.mxu0 0.0
        %1496 = vmatpush1.xpose.msra.mxu0 %v1463
        %1497 = vmatprep.subr.mxu0 0.0
        %1498 = vmatpush2.xpose.msra.mxu0 0.0
        %1499 = vmatprep.subr.mxu0 0.0
        %1500 = vmatpush2.xpose.msra.mxu0 0.0
        %1501 = vmatprep.subr.mxu0 0.0
        %1502 = vmatpush2.xpose.msra.mxu0 0.0
        %1503 = vmatprep.subr.mxu0 0.0
        %1504 = vmatpush2.xpose.msra.mxu0 0.0
        %1505 = vmatprep.subr.mxu0 0.0
        %1506 = vmatpush2.xpose.msra.mxu0 0.0
        %1507 = vmatprep.subr.mxu0 0.0
        %1508 = vmatpush2.xpose.msra.mxu0 0.0
        %1509 = vmatprep.subr.mxu0 0.0
        %1510 = vmatpush2.xpose.msra.mxu0 0.0
        %1511 = vmatprep.subr.mxu0 0.0
        %1512 = vmatpush2.xpose.msra.mxu0 0.0
        %1513 = vmatprep.subr.mxu0 0.0
        %1514 = vmatpush2.xpose.msra.mxu0 0.0
        %1515 = vmatprep.subr.mxu0 0.0
        %1516 = vmatpush2.xpose.msra.mxu0 0.0
        %1517 = vmatprep.subr.mxu0 0.0
        %1518 = vmatpush2.xpose.msra.mxu0 0.0
        %1519 = vmatprep.subr.mxu0 0.0
        %1520 = vmatpush2.xpose.msra.mxu0 0.0
        %1521 = vmatprep.subr.mxu0 0.0
        %1522 = vmatpush2.xpose.msra.mxu0 0.0
        %1523 = vmatprep.subr.mxu0 0.0
        %1524 = vmatpush2.xpose.msra.mxu0 0.0
        %1525 = vmatprep.subr.mxu0 0.0
        %1526 = vmatpush2.xpose.msra.mxu0 0.0
        %1527 = vmatprep.subr.mxu0 0.0
        %1528 = vmatpush2.xpose.msra.mxu0 0.0
        %1529 = vmatprep.mubr.f32.mxu0 0.0
        %1530 = vmatmul.mubr.f32.gmra.mxu0 %v1461
        %v1531 = vpop.f32.mrf.mxu0
        %v1532 = vadd.f32 0.0, %v1531
        %v1533 = vpop.f32.mrf.mxu0
        %1534 = vdwg.mxu0
        %v1535 = vmul.f32 %v1532, 0.2
        %v1536 = vsel %vm858, %v1535, -inf
        %1537 = vmax.xlane.f32.xlu0 %v1536
        %v1538 = vpop.xlane.xlu0 %1537
        %v1539 = vsub.f32 %v1535, %v1538
        %v1540 = vmul.f32 %v1539, 1.442695
        %v1541 = vpow.pop %v1540
        %v1542 = vsel %vm858, %v1541, 0.0
        %1543 = vadd.xlane.f32.xlu0 %v1542
        %v1544 = vpop.xlane.xlu0 %1543
        %v1545 = vrcp.pop %v1544
        %v1546 = vmul.f32 %v1541, %v1545
        %1547 = vrot.lane.b32.xlu0 %v775, 32
        %v1548 = vpop.permute.xlu0 %1547
        %v1551 = vsel %vm858, %v1546, 0
        %1553 = vmatprep.subr.mxu0 0.0
        %1554 = vmatpush1.msra.mxu0 0.0
        %1555 = vmatprep.subr.mxu0 0.0
        %1556 = vmatpush1.msra.mxu0 0.0
        %1557 = vmatprep.subr.mxu0 0.0
        %1558 = vmatpush1.msra.mxu0 0.0
        %1559 = vmatprep.subr.mxu0 0.0
        %1560 = vmatpush1.msra.mxu0 0.0
        %1561 = vmatprep.subr.mxu0 0.0
        %1562 = vmatpush1.msra.mxu0 0.0
        %1563 = vmatprep.subr.mxu0 0.0
        %1564 = vmatpush1.msra.mxu0 0.0
        %1565 = vmatprep.subr.mxu0 0.0
        %1566 = vmatpush1.msra.mxu0 0.0
        %1567 = vmatprep.subr.mxu0 0.0
        %1568 = vmatpush1.msra.mxu0 0.0
        %1569 = vmatprep.subr.mxu0 0.0
        %1570 = vmatpush1.msra.mxu0 0.0
        %1571 = vmatprep.subr.mxu0 0.0
        %1572 = vmatpush1.msra.mxu0 0.0
        %1573 = vmatprep.subr.mxu0 0.0
        %1574 = vmatpush1.msra.mxu0 0.0
        %1575 = vmatprep.subr.mxu0 0.0
        %1576 = vmatpush1.msra.mxu0 0.0
        %1577 = vmatprep.subr.mxu0 0.0
        %1578 = vmatpush1.msra.mxu0 0.0
        %1579 = vmatprep.subr.mxu0 0.0
        %1580 = vmatpush1.msra.mxu0 0.0
        %1581 = vmatprep.subr.mxu0 0.0
        %1582 = vmatpush1.msra.mxu0 0.0
        %1583 = vmatprep.subr.mxu0 0.0
        %1584 = vmatpush1.msra.mxu0 %v1548
        %1585 = vmatprep.subr.mxu0 0.0
        %1586 = vmatpush2.msra.mxu0 0.0
        %1587 = vmatprep.subr.mxu0 0.0
        %1588 = vmatpush2.msra.mxu0 0.0
        %1589 = vmatprep.subr.mxu0 0.0
        %1590 = vmatpush2.msra.mxu0 0.0
        %1591 = vmatprep.subr.mxu0 0.0
        %1592 = vmatpush2.msra.mxu0 0.0
        %1593 = vmatprep.subr.mxu0 0.0
        %1594 = vmatpush2.msra.mxu0 0.0
        %1595 = vmatprep.subr.mxu0 0.0
        %1596 = vmatpush2.msra.mxu0 0.0
        %1597 = vmatprep.subr.mxu0 0.0
        %1598 = vmatpush2.msra.mxu0 0.0
        %1599 = vmatprep.subr.mxu0 0.0
        %1600 = vmatpush2.msra.mxu0 0.0
        %1601 = vmatprep.subr.mxu0 0.0
        %1602 = vmatpush2.msra.mxu0 0.0
        %1603 = vmatprep.subr.mxu0 0.0
        %1604 = vmatpush2.msra.mxu0 0.0
        %1605 = vmatprep.subr.mxu0 0.0
        %1606 = vmatpush2.msra.mxu0 0.0
        %1607 = vmatprep.subr.mxu0 0.0
        %1608 = vmatpush2.msra.mxu0 0.0
        %1609 = vmatprep.subr.mxu0 0.0
        %1610 = vmatpush2.msra.mxu0 0.0
        %1611 = vmatprep.subr.mxu0 0.0
        %1612 = vmatpush2.msra.mxu0 0.0
        %1613 = vmatprep.subr.mxu0 0.0
        %1614 = vmatpush2.msra.mxu0 0.0
        %1615 = vmatprep.subr.mxu0 0.0
        %1616 = vmatpush2.msra.mxu0 0.0
        %1617 = vmatprep.mubr.f32.mxu0 0.0
        %1618 = vmatmul.mubr.f32.gmra.mxu0 %v1551
        %v1619 = vpop.f32.mrf.mxu0
        %v1620 = vadd.f32 0.0, %v1619
        %v1621 = vpop.f32.mrf.mxu0
        %1622 = vdwg.mxu0
        %v1623 = vpack.c.bf16 %v1620, %v1620
        %v1624 = vld [vmem:[#allocation7 + $0x30] sm:$0xf]
        %v1625 = vld [vmem:[#allocation7 + $0x34] sm:$0xf]
        %v1626 = vld [vmem:[#allocation7 + $0x38] sm:$0xf]
        %v1627 = vld [vmem:[#allocation7 + $0x3c] sm:$0xf]
        %v1632 = vunpack.c.l.b16 %v1624
        %v1633 = vunpack.c.l.b16 %v1625
        %v1634 = vunpack.c.l.b16 %v1626
        %v1635 = vunpack.c.l.b16 %v1627
        %v1636 = vpack.c.b16 %v1633, %v1632
        %v1637 = vpack.c.b16 %v1635, %v1634
        %v1641 = vsel %vm780, %v1623, 0
        %1643 = vmatprep.subr.bf16.mxu0 0
        %1644 = vmatpush1.bf16.msra.mxu0 0
        %1645 = vmatprep.subr.bf16.mxu0 0
        %1646 = vmatpush1.bf16.msra.mxu0 0
        %1647 = vmatprep.subr.bf16.mxu0 0
        %1648 = vmatpush1.bf16.msra.mxu0 0
        %1649 = vmatprep.subr.bf16.mxu0 0
        %1650 = vmatpush1.bf16.msra.mxu0 0
        %1651 = vmatprep.subr.bf16.mxu0 0
        %1652 = vmatpush1.bf16.msra.mxu0 0
        %1653 = vmatprep.subr.bf16.mxu0 0
        %1654 = vmatpush1.bf16.msra.mxu0 0
        %1655 = vmatprep.subr.bf16.mxu0 0
        %1656 = vmatpush1.bf16.msra.mxu0 %v1637
        %1657 = vmatprep.subr.bf16.mxu0 0
        %1658 = vmatpush1.bf16.msra.mxu0 %v1636
        %1659 = vmatprep.subr.bf16.mxu0 0
        %1660 = vmatpush2.bf16.msra.mxu0 0
        %1661 = vmatprep.subr.bf16.mxu0 0
        %1662 = vmatpush2.bf16.msra.mxu0 0
        %1663 = vmatprep.subr.bf16.mxu0 0
        %1664 = vmatpush2.bf16.msra.mxu0 0
        %1665 = vmatprep.subr.bf16.mxu0 0
        %1666 = vmatpush2.bf16.msra.mxu0 0
        %1667 = vmatprep.subr.bf16.mxu0 0
        %1668 = vmatpush2.bf16.msra.mxu0 0
        %1669 = vmatprep.subr.bf16.mxu0 0
        %1670 = vmatpush2.bf16.msra.mxu0 0
        %1671 = vmatprep.subr.bf16.mxu0 0
        %1672 = vmatpush2.bf16.msra.mxu0 0
        %1673 = vmatprep.subr.bf16.mxu0 0
        %1674 = vmatpush2.bf16.msra.mxu0 0
        %1675 = vmatprep.mubr.bf16.mxu0 0
        %1676 = vmatmul.mubr.bf16.gmra.mxu0 %v1641
        %v1677 = vpop.f32.mrf.mxu0
        %v1678 = vadd.f32 0.0, %v1677
        %v1679 = vpop.f32.mrf.mxu0
        %v1680 = vpop.f32.mrf.mxu0
        %v1681 = vpop.f32.mrf.mxu0
        %1682 = vdwg.mxu0
        %v1683 = vadd.f32 %v1456, %v1678
        %v1684 = vld [vmem:[%s4] sm:$0x1]
        %v1686 = vlaneseq
        %v1687 = vshrl.u32 %v1686, 7
        %v1688 = vsub.s32 0, %v1687
        %v1689 = vrot.slane %v1684, %v1688
        %v1691 = vadd.f32 %v1683, %v1689
        %v1692 = vadd.f32 %v515, %v1691
        %v1693 = vld [vmem:[%s5] sm:$0x1]
        %v1694 = vld [vmem:[%s6] sm:$0x1]
        %1695 = vadd.xlane.f32.xlu0 %v1692
        %v1696 = vpop.xlane.xlu0 %1695
        %v1697 = vmul.f32 %v1696, 0.01
        %v1698 = vsub.f32 %v1692, %v1697
        %v1699 = vmul.f32 %v1698, %v520
        %v1700 = vmul.f32 %v1699, %v1699
        %1701 = vadd.xlane.f32.xlu0 %v1700
        %v1702 = vpop.xlane.xlu0 %1701
        %v1703 = vmul.f32 %v1702, 0.01
        %v1704 = vadd.f32 %v1703, 1e-05
        %v1705 = vrsqrt.pop %v1704
        %v1706 = vmul.f32 %v1699, %v1705
        %v1708 = vlaneseq
        %v1709 = vshrl.u32 %v1708, 7
        %v1710 = vsub.s32 0, %v1709
        %v1711 = vrot.slane %v1693, %v1710
        %v1713 = vmul.f32 %v1706, %v1711
        %v1715 = vlaneseq
        %v1716 = vshrl.u32 %v1715, 7
        %v1717 = vsub.s32 0, %v1716
        %v1718 = vrot.slane %v1694, %v1717
        %v1720 = vadd.f32 %v1713, %v1718
        %v1721 = vpack.c.bf16 %v1720, %v1720
        %v1722 = vld [vmem:[#allocation8] sm:$0xff]
        %v1723 = vld [vmem:[#allocation8 + $0x8] sm:$0xff]
        %v1724 = vld [vmem:[#allocation8 + $0x10] sm:$0xff]
        %v1725 = vld [vmem:[#allocation8 + $0x18] sm:$0xff]
        %v1726 = vld [vmem:[#allocation8 + $0x20] sm:$0xff]
        %v1727 = vld [vmem:[#allocation8 + $0x28] sm:$0xff]
        %v1728 = vld [vmem:[#allocation8 + $0x30] sm:$0xff]
        %v1729 = vld [vmem:[#allocation8 + $0x38] sm:$0xff]
        %v1730 = vld [vmem:[#allocation8 + $0x40] sm:$0xff]
        %v1731 = vld [vmem:[#allocation8 + $0x48] sm:$0xff]
        %v1732 = vld [vmem:[#allocation8 + $0x50] sm:$0xff]
        %v1733 = vld [vmem:[#allocation8 + $0x58] sm:$0xff]
        %v1734 = vld [vmem:[#allocation8 + $0x60] sm:$0xff]
        %v1735 = vld [vmem:[#allocation8 + $0x68] sm:$0xff]
        %v1736 = vld [vmem:[#allocation8 + $0x70] sm:$0xff]
        %v1737 = vld [vmem:[#allocation8 + $0x78] sm:$0xff]
        %v1738 = vld [vmem:[%s8] sm:$0x3]
        %v1740 = vlaneseq
        %v1741 = vshrl.u32 %v1740, 7
        %v1742 = vsub.s32 0, %v1741
        %v1743 = vrot.slane %v1738, %v1742
        %v1744 = vlaneseq
        %v1745 = vshrl.u32 %v1744, 7
        %v1746 = vsub.s32 1, %v1745
        %v1747 = vrot.slane %v1738, %v1746
        %v1766 = vunpack.c.l.b16 %v1722
        %v1767 = vunpack.c.h.b16 %v1722
        %v1768 = vunpack.c.l.b16 %v1723
        %v1769 = vunpack.c.h.b16 %v1723
        %v1770 = vunpack.c.l.b16 %v1724
        %v1771 = vunpack.c.h.b16 %v1724
        %v1772 = vunpack.c.l.b16 %v1725
        %v1773 = vunpack.c.h.b16 %v1725
        %v1774 = vunpack.c.l.b16 %v1726
        %v1775 = vunpack.c.h.b16 %v1726
        %v1776 = vunpack.c.l.b16 %v1727
        %v1777 = vunpack.c.h.b16 %v1727
        %v1778 = vunpack.c.l.b16 %v1728
        %v1779 = vunpack.c.h.b16 %v1728
        %v1780 = vunpack.c.l.b16 %v1729
        %v1781 = vunpack.c.h.b16 %v1729
        %v1782 = vunpack.c.l.b16 %v1730
        %v1783 = vunpack.c.h.b16 %v1730
        %v1784 = vunpack.c.l.b16 %v1731
        %v1785 = vunpack.c.h.b16 %v1731
        %v1786 = vunpack.c.l.b16 %v1732
        %v1787 = vunpack.c.h.b16 %v1732
        %v1788 = vunpack.c.l.b16 %v1733
        %v1789 = vunpack.c.h.b16 %v1733
        %v1790 = vunpack.c.l.b16 %v1734
        %v1791 = vunpack.c.h.b16 %v1734
        %v1792 = vunpack.c.l.b16 %v1735
        %v1793 = vunpack.c.h.b16 %v1735
        %v1794 = vunpack.c.l.b16 %v1736
        %v1795 = vunpack.c.h.b16 %v1736
        %v1796 = vunpack.c.l.b16 %v1737
        %v1797 = vunpack.c.h.b16 %v1737
        %v1798 = vpack.c.b16 %v1768, %v1766
        %v1799 = vpack.c.b16 %v1769, %v1767
        %v1800 = vpack.c.b16 %v1772, %v1770
        %v1801 = vpack.c.b16 %v1773, %v1771
        %v1802 = vpack.c.b16 %v1776, %v1774
        %v1803 = vpack.c.b16 %v1777, %v1775
        %v1804 = vpack.c.b16 %v1780, %v1778
        %v1805 = vpack.c.b16 %v1781, %v1779
        %v1806 = vpack.c.b16 %v1784, %v1782
        %v1807 = vpack.c.b16 %v1785, %v1783
        %v1808 = vpack.c.b16 %v1788, %v1786
        %v1809 = vpack.c.b16 %v1789, %v1787
        %v1810 = vpack.c.b16 %v1792, %v1790
        %v1811 = vpack.c.b16 %v1793, %v1791
        %v1812 = vpack.c.b16 %v1796, %v1794
        %v1813 = vpack.c.b16 %v1797, %v1795
        %1830 = vmatprep.subr.bf16.mxu0 %v1813
        %1831 = vmatpush1.bf16.msra.mxu0 %v1812
        %1832 = vmatprep.subr.bf16.mxu0 %v1811
        %1833 = vmatpush1.bf16.msra.mxu0 %v1810
        %1834 = vmatprep.subr.bf16.mxu0 %v1809
        %1835 = vmatpush1.bf16.msra.mxu0 %v1808
        %1836 = vmatprep.subr.bf16.mxu0 %v1807
        %1837 = vmatpush1.bf16.msra.mxu0 %v1806
        %1838 = vmatprep.subr.bf16.mxu0 %v1805
        %1839 = vmatpush1.bf16.msra.mxu0 %v1804
        %1840 = vmatprep.subr.bf16.mxu0 %v1803
        %1841 = vmatpush1.bf16.msra.mxu0 %v1802
        %1842 = vmatprep.subr.bf16.mxu0 %v1801
        %1843 = vmatpush1.bf16.msra.mxu0 %v1800
        %1844 = vmatprep.subr.bf16.mxu0 %v1799
        %1845 = vmatpush1.bf16.msra.mxu0 %v1798
        %1846 = vmatprep.subr.bf16.mxu0 0
        %1847 = vmatpush2.bf16.msra.mxu0 0
        %1848 = vmatprep.subr.bf16.mxu0 0
        %1849 = vmatpush2.bf16.msra.mxu0 0
        %1850 = vmatprep.subr.bf16.mxu0 0
        %1851 = vmatpush2.bf16.msra.mxu0 0
        %1852 = vmatprep.subr.bf16.mxu0 0
        %1853 = vmatpush2.bf16.msra.mxu0 0
        %1854 = vmatprep.subr.bf16.mxu0 0
        %1855 = vmatpush2.bf16.msra.mxu0 0
        %1856 = vmatprep.subr.bf16.mxu0 0
        %1857 = vmatpush2.bf16.msra.mxu0 0
        %1858 = vmatprep.subr.bf16.mxu0 0
        %1859 = vmatpush2.bf16.msra.mxu0 0
        %1860 = vmatprep.subr.bf16.mxu0 0
        %1861 = vmatpush2.bf16.msra.mxu0 0
        %1862 = vmatprep.mubr.bf16.mxu0 0
        %1863 = vmatmul.mubr.bf16.gmra.mxu0 %v1721
        %v1864 = vpop.f32.mrf.mxu0
        %v1865 = vadd.f32 %v1743, %v1864
        %v1866 = vpop.f32.mrf.mxu0
        %v1867 = vadd.f32 %v1747, %v1866
        %v1868 = vpop.f32.mrf.mxu0
        %v1869 = vpop.f32.mrf.mxu0
        %1870 = vdwg.mxu0
        %vm1871 = vcmp.ge.f32.partialorder %v1865, 0.0
        %vm1872 = vcmp.ge.f32.partialorder %v1867, 0.0
        %v1873 = vmul.f32 %v1865, 0.01
        %v1874 = vmul.f32 %v1867, 0.01
        %v1875 = vsel %vm1871, %v1865, %v1873
        %v1876 = vsel %vm1872, %v1867, %v1874
        %v1877 = vpack.c.bf16 %v1875, %v1875
        %v1878 = vpack.c.bf16 %v1876, %v1876
        %v1879 = vld [vmem:[#allocation10] sm:$0xf]
        %v1880 = vld [vmem:[#allocation10 + $0x4] sm:$0xf]
        %v1881 = vld [vmem:[#allocation10 + $0x8] sm:$0xf]
        %v1882 = vld [vmem:[#allocation10 + $0xc] sm:$0xf]
        %v1883 = vld [vmem:[#allocation10 + $0x10] sm:$0xf]
        %v1884 = vld [vmem:[#allocation10 + $0x14] sm:$0xf]
        %v1885 = vld [vmem:[#allocation10 + $0x18] sm:$0xf]
        %v1886 = vld [vmem:[#allocation10 + $0x1c] sm:$0xf]
        %v1887 = vld [vmem:[#allocation10 + $0x20] sm:$0xf]
        %v1888 = vld [vmem:[#allocation10 + $0x24] sm:$0xf]
        %v1889 = vld [vmem:[#allocation10 + $0x28] sm:$0xf]
        %v1890 = vld [vmem:[#allocation10 + $0x2c] sm:$0xf]
        %v1891 = vld [vmem:[#allocation10 + $0x30] sm:$0xf]
        %v1892 = vld [vmem:[#allocation10 + $0x34] sm:$0xf]
        %v1893 = vld [vmem:[#allocation10 + $0x38] sm:$0xf]
        %v1894 = vld [vmem:[#allocation10 + $0x3c] sm:$0xf]
        %v1895 = vld [vmem:[#allocation10 + $0x40] sm:$0xf]
        %v1896 = vld [vmem:[#allocation10 + $0x44] sm:$0xf]
        %v1897 = vld [vmem:[#allocation10 + $0x48] sm:$0xf]
        %v1898 = vld [vmem:[#allocation10 + $0x4c] sm:$0xf]
        %v1899 = vld [vmem:[#allocation10 + $0x50] sm:$0xf]
        %v1900 = vld [vmem:[#allocation10 + $0x54] sm:$0xf]
        %v1901 = vld [vmem:[#allocation10 + $0x58] sm:$0xf]
        %v1902 = vld [vmem:[#allocation10 + $0x5c] sm:$0xf]
        %v1903 = vld [vmem:[#allocation10 + $0x60] sm:$0xf]
        %v1904 = vld [vmem:[#allocation10 + $0x64] sm:$0xf]
        %v1905 = vld [vmem:[#allocation10 + $0x68] sm:$0xf]
        %v1906 = vld [vmem:[#allocation10 + $0x6c] sm:$0xf]
        %v1907 = vld [vmem:[#allocation10 + $0x70] sm:$0xf]
        %v1908 = vld [vmem:[#allocation10 + $0x74] sm:$0xf]
        %v1909 = vld [vmem:[#allocation10 + $0x78] sm:$0xf]
        %v1910 = vld [vmem:[#allocation10 + $0x7c] sm:$0xf]
        %v1911 = vld [vmem:[%s10] sm:$0x1]
        %v1913 = vlaneseq
        %v1914 = vshrl.u32 %v1913, 7
        %v1915 = vsub.s32 0, %v1914
        %v1916 = vrot.slane %v1911, %v1915
        %v1950 = vunpack.c.l.b16 %v1879
        %v1951 = vunpack.c.l.b16 %v1880
        %v1952 = vunpack.c.l.b16 %v1881
        %v1953 = vunpack.c.l.b16 %v1882
        %v1954 = vunpack.c.l.b16 %v1883
        %v1955 = vunpack.c.l.b16 %v1884
        %v1956 = vunpack.c.l.b16 %v1885
        %v1957 = vunpack.c.l.b16 %v1886
        %v1958 = vunpack.c.l.b16 %v1887
        %v1959 = vunpack.c.l.b16 %v1888
        %v1960 = vunpack.c.l.b16 %v1889
        %v1961 = vunpack.c.l.b16 %v1890
        %v1962 = vunpack.c.l.b16 %v1891
        %v1963 = vunpack.c.l.b16 %v1892
        %v1964 = vunpack.c.l.b16 %v1893
        %v1965 = vunpack.c.l.b16 %v1894
        %v1966 = vunpack.c.l.b16 %v1895
        %v1967 = vunpack.c.l.b16 %v1896
        %v1968 = vunpack.c.l.b16 %v1897
        %v1969 = vunpack.c.l.b16 %v1898
        %v1970 = vunpack.c.l.b16 %v1899
        %v1971 = vunpack.c.l.b16 %v1900
        %v1972 = vunpack.c.l.b16 %v1901
        %v1973 = vunpack.c.l.b16 %v1902
        %v1974 = vunpack.c.l.b16 %v1903
        %v1975 = vunpack.c.l.b16 %v1904
        %v1976 = vunpack.c.l.b16 %v1905
        %v1977 = vunpack.c.l.b16 %v1906
        %v1978 = vunpack.c.l.b16 %v1907
        %v1979 = vunpack.c.l.b16 %v1908
        %v1980 = vunpack.c.l.b16 %v1909
        %v1981 = vunpack.c.l.b16 %v1910
        %v1982 = vpack.c.b16 %v1951, %v1950
        %v1983 = vpack.c.b16 %v1953, %v1952
        %v1984 = vpack.c.b16 %v1955, %v1954
        %v1985 = vpack.c.b16 %v1957, %v1956
        %v1986 = vpack.c.b16 %v1959, %v1958
        %v1987 = vpack.c.b16 %v1961, %v1960
        %v1988 = vpack.c.b16 %v1963, %v1962
        %v1989 = vpack.c.b16 %v1965, %v1964
        %v1990 = vpack.c.b16 %v1967, %v1966
        %v1991 = vpack.c.b16 %v1969, %v1968
        %v1992 = vpack.c.b16 %v1971, %v1970
        %v1993 = vpack.c.b16 %v1973, %v1972
        %v1994 = vpack.c.b16 %v1975, %v1974
        %v1995 = vpack.c.b16 %v1977, %v1976
        %v1996 = vpack.c.b16 %v1979, %v1978
        %v1997 = vpack.c.b16 %v1981, %v1980
        %2014 = vmatprep.subr.bf16.mxu0 0
        %2015 = vmatpush1.bf16.msra.mxu0 %v1989
        %2016 = vmatprep.subr.bf16.mxu0 0
        %2017 = vmatpush1.bf16.msra.mxu0 %v1988
        %2018 = vmatprep.subr.bf16.mxu0 0
        %2019 = vmatpush1.bf16.msra.mxu0 %v1987
        %2020 = vmatprep.subr.bf16.mxu0 0
        %2021 = vmatpush1.bf16.msra.mxu0 %v1986
        %2022 = vmatprep.subr.bf16.mxu0 0
        %2023 = vmatpush1.bf16.msra.mxu0 %v1985
        %2024 = vmatprep.subr.bf16.mxu0 0
        %2025 = vmatpush1.bf16.msra.mxu0 %v1984
        %2026 = vmatprep.subr.bf16.mxu0 0
        %2027 = vmatpush1.bf16.msra.mxu0 %v1983
        %2028 = vmatprep.subr.bf16.mxu0 0
        %2029 = vmatpush1.bf16.msra.mxu0 %v1982
        %2030 = vmatprep.subr.bf16.mxu0 0
        %2031 = vmatpush2.bf16.msra.mxu0 %v1997
        %2032 = vmatprep.subr.bf16.mxu0 0
        %2033 = vmatpush2.bf16.msra.mxu0 %v1996
        %2034 = vmatprep.subr.bf16.mxu0 0
        %2035 = vmatpush2.bf16.msra.mxu0 %v1995
        %2036 = vmatprep.subr.bf16.mxu0 0
        %2037 = vmatpush2.bf16.msra.mxu0 %v1994
        %2038 = vmatprep.subr.bf16.mxu0 0
        %2039 = vmatpush2.bf16.msra.mxu0 %v1993
        %2040 = vmatprep.subr.bf16.mxu0 0
        %2041 = vmatpush2.bf16.msra.mxu0 %v1992
        %2042 = vmatprep.subr.bf16.mxu0 0
        %2043 = vmatpush2.bf16.msra.mxu0 %v1991
        %2044 = vmatprep.subr.bf16.mxu0 0
        %2045 = vmatpush2.bf16.msra.mxu0 %v1990
        %2046 = vmatprep.mubr.bf16.mxu0 %v1878
        %2047 = vmatmul.mubr.bf16.gmra.mxu0 %v1877
        %v2048 = vpop.f32.mrf.mxu0
        %v2049 = vadd.f32 %v1916, %v2048
        %v2050 = vpop.f32.mrf.mxu0
        %v2051 = vpop.f32.mrf.mxu0
        %v2052 = vpop.f32.mrf.mxu0
        %2053 = vdwg.mxu0
        %v2054 = vadd.f32 %v1720, %v2049
        %v2055 = vld [vmem:[%s11] sm:$0x1]
        %v2056 = vld [vmem:[%s12] sm:$0x1]
        %2057 = vadd.xlane.f32.xlu0 %v2054
        %v2058 = vpop.xlane.xlu0 %2057
        %v2059 = vmul.f32 %v2058, 0.01
        %v2060 = vsub.f32 %v2054, %v2059
        %v2061 = vmul.f32 %v2060, %v520
        %v2062 = vmul.f32 %v2061, %v2061
        %2063 = vadd.xlane.f32.xlu0 %v2062
        %v2064 = vpop.xlane.xlu0 %2063
        %v2065 = vmul.f32 %v2064, 0.01
        %v2066 = vadd.f32 %v2065, 1e-05
        %v2067 = vrsqrt.pop %v2066
        %v2068 = vmul.f32 %v2061, %v2067
        %v2070 = vlaneseq
        %v2071 = vshrl.u32 %v2070, 7
        %v2072 = vsub.s32 0, %v2071
        %v2073 = vrot.slane %v2055, %v2072
        %v2075 = vmul.f32 %v2068, %v2073
        %v2077 = vlaneseq
        %v2078 = vshrl.u32 %v2077, 7
        %v2079 = vsub.s32 0, %v2078
        %v2080 = vrot.slane %v2056, %v2079
        %v2082 = vadd.f32 %v2075, %v2080
        %2083 = vst [vmem:[%s513] sm:$0xff] %v2082
        %s2084 = sand.u32 %s318, 1
        %s2085 = scalar_lea.sflag [#allocation4], %s2084
        %s2086 = sand.u32 %s318, 1
        %s2087 = smul.addr %s2086, 8
        %s2088 = scalar_lea.vmem [#allocation11], %s2087
        // Predicated region
        $region93: #{tpu_custom_call.1} parent=71 // pred_check
          %p2089 = pneg %p328
        $region94: #{tpu_custom_call.1} parent=71 // pred_check_branch
          %2091 = sbr.rel (%p2089) target = $region96
        $region95: #{tpu_custom_call.1} parent=71 // pred_region
          %s2093 = ssub.s32 128, 128
          %2094 = vsyncadd %s2085, %s2093
          %s2095 = smul.addr %s32, 128
          %s2096 = scalar_lea.hbm %s13, %s2095
          %s2098 = sshll.u32 %s2088, 4
          %s2099 = int_to_ptr.vmem [resolvable:$true] %s2098
          %2101 = dma.vmem_to_hbm [thread:$0]  %s2099, 128, %s2096, %s2085
        $region96: #{tpu_custom_call.1} parent=71 // pred_fallthru
          _
      $region72: #{tpu_custom_call.1} parent=5 // pred_fallthru
        _
      %p2102 = scmp.le.s32.totalorder 2, %s27
      // Predicated region
      $region97: #{tpu_custom_call.1} parent=5 // pred_check
        %p2103 = pneg %p2102
      $region98: #{tpu_custom_call.1} parent=5 // pred_check_branch
        %2105 = sbr.rel (%p2103) target = $region100
      $region99: #{tpu_custom_call.1} parent=5 // pred_region
        %s2106 = ssub.s32 %s27, 2
        // Predicated region
        $region101: #{tpu_custom_call.1} parent=99 // pred_check
          %p2107 = pneg %p334
        $region102: #{tpu_custom_call.1} parent=99 // pred_check_branch
          %2109 = sbr.rel (%p2107) target = $region104
        $region103: #{tpu_custom_call.1} parent=99 // pred_region
          %s2110 = sand.u32 %s319, 1
          %s2111 = scalar_lea.sflag [#allocation4], %s2110
          %s2112 = sand.u32 %s319, 1
          %s2113 = smul.addr %s2112, 8
          %s2114 = scalar_lea.vmem [#allocation11], %s2113
          %2115 = dma.done %s2111, 128
        $region104: #{tpu_custom_call.1} parent=99 // pred_fallthru
          _
      $region100: #{tpu_custom_call.1} parent=5 // pred_fallthru
        _
    $region6: #{tpu_custom_call.1} parent=1 // loop_footer
      %s31 = sadd.s32 1, %s27
    $region7: #{tpu_custom_call.1} parent=1 // loop_footer_branch
      %26 = sbr.rel target = $region3
    $region8: #{tpu_custom_call.1} parent=1 // loop_exit
      _
    %2116 = vsyncpa [#allocation3], 1
    %s2117 = scalar_lea.sflag [#allocation3], 1
    %2118 = vsyncpa %s2117, 1
    %2119 = vsyncpa [#allocation6], 1
    %2120 = vsyncpa [#allocation9], 1
    %2121 = vsyncpa [#allocation4], 1
    %s2122 = scalar_lea.sflag [#allocation4], 1
    %2123 = vsyncpa %s2122, 1

</llo_original>
